<compile_context>
chip_gen: v6e
topology: v6e:2x2x1
jax: 0.10.0
libtpu: 0.0.40
codegen_flags: <defaults>
</compile_context>

<pallas_src>
import functools
import math

import jax
import jax.numpy as jnp
from jax.experimental import pallas as pl
from jax.experimental.pallas import tpu as pltpu

EPS = 1e-6
NUM_GROUPS = 32  # nn.GroupNorm(num_groups=32, ...)


def _group_norm_kernel(x_ref, gamma_ref, beta_ref, o_ref):
    # x_ref / o_ref block: (1, gpb, R, L) in the input's native dtype
    # gamma/beta block:    (gpb, R, 1)    f32
    x = x_ref[0].astype(jnp.float32)                       # (gpb, R, L)
    _, r, l = x.shape
    inv_n = 1.0 / float(r * l)

    # Two-pass mean / biased variance per group (matches torch.nn.GroupNorm).
    row_sum = jnp.sum(x, axis=2, keepdims=True)            # lane reduce    (gpb, R, 1)
    mean = jnp.sum(row_sum, axis=1, keepdims=True) * inv_n  # sublane reduce (gpb, 1, 1)
    d = x - mean
    sq = jnp.sum(d * d, axis=2, keepdims=True)              # (gpb, R, 1)
    var = jnp.sum(sq, axis=1, keepdims=True) * inv_n        # (gpb, 1, 1)
    inv_std = jax.lax.rsqrt(jnp.maximum(var, 0.0) + EPS)

    # Fold normalization + affine into tiny per-row scale/shift, then apply
    # with one fused big-tensor multiply-add that reads x directly.
    scale = gamma_ref[...] * inv_std                         # (gpb, R, 1)
    shift = beta_ref[...] - mean * scale                     # (gpb, R, 1)
    o_ref[0] = (x * scale + shift).astype(o_ref.dtype)


def _sublane_multiple(itemsize):
    # f32 packs 8 sublanes per vreg, bf16 16, int8 32.
    return 8 * max(1, 4 // int(itemsize))


def _padded_slab_bytes(r, l, dtype):
    """VMEM bytes of one (r, l) slab after (sublane, 128) tile padding."""
    itemsize = jnp.dtype(dtype).itemsize
    sub = _sublane_multiple(itemsize)
    r_pad = -(-r // sub) * sub
    l_pad = -(-l // 128) * 128
    return r_pad * l_pad * itemsize


def _pick_spatial_fold(cg, hw):
    """Fold factor s so each group is viewed as (cg*s, hw//s) (free reshape)."""
    if cg >= 8 or hw <= 1:
        return 1
    smax = min(8 // cg, hw)
    # (1) fill sublanes while keeping the lane axis a multiple of 128.
    for s in range(smax, 1, -1):
        if hw % s == 0 and (hw // s) % 128 == 0:
            return s
    # (2) already lane-dense: keep it (lane-dense stores are the bigger lever).
    if hw % 128 == 0:
        return 1
    # (3) fold keeping >= 128 lanes, else (4) any legal fold.
    for s in range(smax, 1, -1):
        if hw % s == 0 and (hw // s) >= 128:
            return s
    for s in range(smax, 1, -1):
        if hw % s == 0:
            return s
    return 1


def _vmem_limit_bytes():
    """Generation-aware scoped-VMEM request with headroom; safe fallback."""
    try:
        cap = int(pltpu.get_tpu_info().vmem_capacity_bytes)
    except Exception:
        cap = 64 << 20  # conservative (v7x per-TC physical)
    # Leave >= 1/4 of physical for compiler-internal scratch; cap at 96 MiB.
    return int(max(32 << 20, min(cap * 3 // 4, 96 << 20)))


@functools.partial(jax.jit, static_argnames=("num_groups",))
def group_norm_pallas(x, gamma, beta, *, num_groups=NUM_GROUPS):
    """nn.GroupNorm(num_groups, C, eps=1e-6, affine=True) forward.

    x: (B, C, *spatial) in any float dtype (kept in its native dtype end to
    end; statistics computed in f32 inside the kernel).  gamma/beta: (C,).
    """
    B, C = x.shape[0], x.shape[1]
    assert C % num_groups == 0, "GroupNorm requires channels % num_groups == 0"
    G = num_groups
    Cg = C // G
    HW = int(math.prod(x.shape[2:])) if x.ndim > 2 else 1

    s = _pick_spatial_fold(Cg, HW)
    R, L = Cg * s, HW // s

    # Free, row-major reshapes only: no transposes, no dtype cast passes on x.
    xg = x.reshape(B, G, R, L)
    gamma_g = jnp.repeat(gamma.astype(jnp.float32).reshape(G, Cg), s, axis=1).reshape(G, R, 1)
    beta_g = jnp.repeat(beta.astype(jnp.float32).reshape(G, Cg), s, axis=1).reshape(G, R, 1)

    # Honest per-block VMEM accounting: double-buffered input + output blocks
    # (native dtype, tile-padded) plus ~2 f32 in-kernel temporaries per group.
    vmem_limit = _vmem_limit_bytes()
    block_budget = vmem_limit // 2
    per_group = (2 * _padded_slab_bytes(R, L, x.dtype)            # input, double-buffered
                 + 2 * _padded_slab_bytes(R, L, x.dtype)          # output, double-buffered
                 + 2 * _padded_slab_bytes(R, L, jnp.float32))     # f32 temps (x32, d)
    gpb = max(1, min(G, block_budget // max(per_group, 1)))
    if B == 1 and G >= 2:
        # Ensure >= 2 total grid steps so both v7x TensorCores get work.
        gpb = min(gpb, G // 2)
    while G % gpb != 0:
        gpb -= 1
    n_tiles = G // gpb

    out = pl.pallas_call(
        _group_norm_kernel,
        out_shape=jax.ShapeDtypeStruct((B, G, R, L), x.dtype),
        grid_spec=pltpu.PrefetchScalarGridSpec(
            num_scalar_prefetch=0,
            # Batch on the inner axis: gamma/beta block indices are constant
            # along it, so their tiny DMAs are not re-issued every grid step.
            grid=(n_tiles, B),
            in_specs=[
                pl.BlockSpec((1, gpb, R, L), lambda t, b: (b, t, 0, 0)),  # x
                pl.BlockSpec((gpb, R, 1), lambda t, b: (t, 0, 0)),        # gamma
                pl.BlockSpec((gpb, R, 1), lambda t, b: (t, 0, 0)),        # beta
            ],
            out_specs=pl.BlockSpec((1, gpb, R, L), lambda t, b: (b, t, 0, 0)),
        ),
        compiler_params=pltpu.CompilerParams(
            dimension_semantics=("parallel", "parallel"),
            vmem_limit_bytes=vmem_limit),
    )(xg, gamma_g, beta_g)

    return out.reshape(x.shape)


def group_norm_ref(x, gamma, beta, num_groups=NUM_GROUPS):
    """Pure-JAX reference mirroring torch.nn.GroupNorm (biased var, eps=1e-6)."""
    B, C = x.shape[0], x.shape[1]
    G = num_groups
    xf = x.astype(jnp.float32).reshape(B, G, -1)
    mean = jnp.mean(xf, axis=2, keepdims=True)
    var = jnp.mean((xf - mean) ** 2, axis=2, keepdims=True)
    y = ((xf - mean) / jnp.sqrt(var + EPS)).reshape(x.shape)
    gshape = (1, C) + (1,) * (x.ndim - 2)
    return (y * gamma.astype(jnp.float32).reshape(gshape)
            + beta.astype(jnp.float32).reshape(gshape))


if __name__ == "__main__":
    # GroupNorm(num_groups=32) requires channels % 32 == 0.
    B, C, H, W = 2, 64, 16, 16
    key = jax.random.PRNGKey(0)
    kx, kg, kb = jax.random.split(key, 3)
    x = jax.random.normal(kx, (B, C, H, W), jnp.float32)
    gamma = 1.0 + 0.1 * jax.random.normal(kg, (C,), jnp.float32)
    beta = 0.1 * jax.random.normal(kb, (C,), jnp.float32)

    # f32 path
    out = jax.block_until_ready(group_norm_pallas(x, gamma, beta))
    ref = jax.block_until_ready(group_norm_ref(x, gamma, beta))
    assert out.shape == (B, C, H, W) and out.dtype == x.dtype
    err = float(jnp.max(jnp.abs(out.astype(jnp.float32) - ref)))
    assert err < 1e-4, err

    # bf16 path: x stays bf16 end-to-end (cast to f32 happens inside the kernel).
    xb = x.astype(jnp.bfloat16)
    outb = jax.block_until_ready(group_norm_pallas(xb, gamma, beta))
    refb = jax.block_until_ready(group_norm_ref(xb.astype(jnp.float32), gamma, beta))
    assert outb.dtype == jnp.bfloat16
    errb = float(jnp.max(jnp.abs(outb.astype(jnp.float32) - refb)))
    assert errb < 1e-1, errb

    print("KERNEL_OK")
</pallas_src>

<mosaic_0001>
module attributes {stable_mosaic.version = 11 : i64} {
  func.func @_group_norm_kernel(%arg0: i32, %arg1: i32, %arg2: memref<1x32x4x128xf32, #tpu.memory_space<vmem>>, %arg3: memref<32x4x1xf32, #tpu.memory_space<vmem>>, %arg4: memref<32x4x1xf32, #tpu.memory_space<vmem>>, %arg5: memref<1x32x4x128xf32, #tpu.memory_space<vmem>>) attributes {dimension_semantics = [#tpu.dimension_semantics<parallel>, #tpu.dimension_semantics<parallel>], iteration_bounds = array<i64: 1, 2>, scalar_prefetch = 0 : i64, scratch_operands = 0 : i64, tpu.core_type = #tpu.core_type<tc>, window_params = [{transform_indices = @transform_0, window_bounds = array<i64: 1, 32, 4, 128>}, {transform_indices = @transform_1, window_bounds = array<i64: 32, 4, 1>}, {transform_indices = @transform_2, window_bounds = array<i64: 32, 4, 1>}, {transform_indices = @transform_3, window_bounds = array<i64: 1, 32, 4, 128>}]} {
    %c0 = arith.constant 0 : index
    %c0_0 = arith.constant 0 : index
    %c0_1 = arith.constant 0 : index
    %c0_2 = arith.constant 0 : index
    %0 = vector.load %arg2[%c0, %c0_0, %c0_1, %c0_2] : memref<1x32x4x128xf32, #tpu.memory_space<vmem>>, vector<1x32x4x128xf32>
    %1 = vector.shape_cast %0 : vector<1x32x4x128xf32> to vector<32x4x128xf32>
    %cst = arith.constant dense<0.000000e+00> : vector<32x4xf32>
    %2 = vector.multi_reduction <add>, %1, %cst [2] : vector<32x4x128xf32> to vector<32x4xf32>
    %3 = vector.shape_cast %2 : vector<32x4xf32> to vector<32x4x1xf32>
    %cst_3 = arith.constant dense<0.000000e+00> : vector<32x1xf32>
    %4 = vector.multi_reduction <add>, %3, %cst_3 [1] : vector<32x4x1xf32> to vector<32x1xf32>
    %5 = vector.shape_cast %4 : vector<32x1xf32> to vector<32x1x1xf32>
    %cst_4 = arith.constant 0.001953125 : f32
    %6 = vector.broadcast %cst_4 : f32 to vector<32x1x1xf32>
    %7 = arith.mulf %5, %6 : vector<32x1x1xf32>
    %8 = vector.broadcast %7 : vector<32x1x1xf32> to vector<32x4x128xf32>
    %9 = arith.subf %1, %8 : vector<32x4x128xf32>
    %10 = arith.mulf %9, %9 : vector<32x4x128xf32>
    %cst_5 = arith.constant dense<0.000000e+00> : vector<32x4xf32>
    %11 = vector.multi_reduction <add>, %10, %cst_5 [2] : vector<32x4x128xf32> to vector<32x4xf32>
    %12 = vector.shape_cast %11 : vector<32x4xf32> to vector<32x4x1xf32>
    %cst_6 = arith.constant dense<0.000000e+00> : vector<32x1xf32>
    %13 = vector.multi_reduction <add>, %12, %cst_6 [1] : vector<32x4x1xf32> to vector<32x1xf32>
    %14 = vector.shape_cast %13 : vector<32x1xf32> to vector<32x1x1xf32>
    %cst_7 = arith.constant 0.001953125 : f32
    %15 = vector.broadcast %cst_7 : f32 to vector<32x1x1xf32>
    %16 = arith.mulf %14, %15 : vector<32x1x1xf32>
    %cst_8 = arith.constant 0.000000e+00 : f32
    %17 = vector.broadcast %cst_8 : f32 to vector<32x1x1xf32>
    %18 = arith.maximumf %16, %17 : vector<32x1x1xf32>
    %cst_9 = arith.constant 9.99999997E-7 : f32
    %19 = vector.broadcast %cst_9 : f32 to vector<32x1x1xf32>
    %20 = arith.addf %18, %19 : vector<32x1x1xf32>
    %21 = math.rsqrt %20 : vector<32x1x1xf32>
    %c0_10 = arith.constant 0 : index
    %c0_11 = arith.constant 0 : index
    %c0_12 = arith.constant 0 : index
    %22 = vector.load %arg3[%c0_10, %c0_11, %c0_12] : memref<32x4x1xf32, #tpu.memory_space<vmem>>, vector<32x4x1xf32>
    %23 = vector.broadcast %21 : vector<32x1x1xf32> to vector<32x4x1xf32>
    %24 = arith.mulf %22, %23 : vector<32x4x1xf32>
    %c0_13 = arith.constant 0 : index
    %c0_14 = arith.constant 0 : index
    %c0_15 = arith.constant 0 : index
    %25 = vector.load %arg4[%c0_13, %c0_14, %c0_15] : memref<32x4x1xf32, #tpu.memory_space<vmem>>, vector<32x4x1xf32>
    %26 = vector.broadcast %7 : vector<32x1x1xf32> to vector<32x4x1xf32>
    %27 = arith.mulf %26, %24 : vector<32x4x1xf32>
    %28 = arith.subf %25, %27 : vector<32x4x1xf32>
    %29 = vector.broadcast %24 : vector<32x4x1xf32> to vector<32x4x128xf32>
    %30 = arith.mulf %1, %29 : vector<32x4x128xf32>
    %31 = vector.broadcast %28 : vector<32x4x1xf32> to vector<32x4x128xf32>
    %32 = arith.addf %30, %31 : vector<32x4x128xf32>
    %c0_16 = arith.constant 0 : index
    %c0_17 = arith.constant 0 : index
    %c0_18 = arith.constant 0 : index
    %c0_19 = arith.constant 0 : index
    %33 = vector.load %arg5[%c0_16, %c0_17, %c0_18, %c0_19] : memref<1x32x4x128xf32, #tpu.memory_space<vmem>>, vector<1x32x4x128xf32>
    %34 = vector.shape_cast %33 : vector<1x32x4x128xf32> to vector<32x4x128xf32>
    %35 = vector.shape_cast %32 : vector<32x4x128xf32> to vector<1x32x4x128xf32>
    tpu.vector_store %arg5[%c0_16, %c0_17, %c0_18, %c0_19], %35 {strides = array<i32>} : memref<1x32x4x128xf32, #tpu.memory_space<vmem>>, vector<1x32x4x128xf32>,
    return
  }
  func.func @transform_0(%arg0: i32, %arg1: i32) -> (i32, i32, i32, i32) {
    %c0_i32 = arith.constant 0 : i32
    %c0_i32_0 = arith.constant 0 : i32
    %c0_i32_1 = arith.constant 0 : i32
    return %arg1, %arg0, %c0_i32, %c0_i32_0 : i32, i32, i32, i32
  }
  func.func @transform_1(%arg0: i32, %arg1: i32) -> (i32, i32, i32) {
    %c0_i32 = arith.constant 0 : i32
    %c0_i32_0 = arith.constant 0 : i32
    %c0_i32_1 = arith.constant 0 : i32
    return %arg0, %c0_i32, %c0_i32_0 : i32, i32, i32
  }
  func.func @transform_2(%arg0: i32, %arg1: i32) -> (i32, i32, i32) {
    %c0_i32 = arith.constant 0 : i32
    %c0_i32_0 = arith.constant 0 : i32
    %c0_i32_1 = arith.constant 0 : i32
    return %arg0, %c0_i32, %c0_i32_0 : i32, i32, i32
  }
  func.func @transform_3(%arg0: i32, %arg1: i32) -> (i32, i32, i32, i32) {
    %c0_i32 = arith.constant 0 : i32
    %c0_i32_0 = arith.constant 0 : i32
    %c0_i32_1 = arith.constant 0 : i32
    return %arg1, %arg0, %c0_i32, %c0_i32_0 : i32, i32, i32, i32
  }
}

</mosaic_0001>

<llo_original>
// kernel: group_norm_pallas.1
$region0: #{group_norm_pallas.1}
  #allocation0 [shape = 'u32[]', space=smem, size = 0x4, offset = 0x4, fixed_abs, tag = 'smem constant byte address 0x4 - core index']
  #allocation1 [shape = 'u32[144,128]{1,0:T(1,128)}', space=vmem, size = 0x12000, scoped, tag = 'internal scratch']
  %s0 = inlined_call_operand.vmem [shape: f32[2,32,4,128], index: 0, kind: input, shape index: {}]
  %s1 = inlined_call_operand.vmem [shape: f32[32,4,1], index: 1, kind: input, shape index: {}]
  %s2 = inlined_call_operand.vmem [shape: f32[32,4,1], index: 2, kind: input, shape index: {}]
  %s3 = inlined_call_operand.vmem [shape: f32[2,32,4,128], index: 3, kind: output, shape index: {}]
  %s4 = sld [smem:[#allocation0]]
  $region45: #{group_norm_pallas.1} parent=0
    _
  %s6 = ssub.s32 1, %s4
  %s7 = scalar_select 0, %s6, %s4
  loop: start=0, step=1, limit=4
  $region2: #{group_norm_pallas.1} parent=0 // loop_pre_header
    _
  $region3: #{group_norm_pallas.1} parent=0 // loop_header
    %s9 = sphi 0, %s13
    %p10 = scmp.ge.s32.totalorder %s9, 4
    %s16 = sphi 0, %s28
    %s17 = sphi 0, %s24
    %s18 = sphi 0, %s16
    %s19 = sphi 0, %s17
    %s20 = sphi 0, %s18
    %s21 = sphi 0, %s19
    %s33 = sphi 0, %s35
    %s36 = sphi 0, %s33
    %s37 = sphi 0, %s36
    %s53 = sphi 0, %s37
    %s59 = sphi 0, %s61
    %s62 = sphi 0, %s59
    %s63 = sphi 0, %s62
    %s79 = sphi 0, %s63
    %s85 = sphi 0, %s87
    %s88 = sphi 0, %s85
    %s89 = sphi 0, %s88
    %s105 = sphi 0, %s89
    %s113 = sphi 0, %s115
    %s116 = sphi 0, %s113
    %s117 = sphi 0, %s116
    %s133 = sphi 0, %s117
  $region4: #{group_norm_pallas.1} parent=0 // loop_header_branch
    %12 = sbr.rel (%p10) target = $region8
  $region5: #{group_norm_pallas.1} parent=0 // loop_body
    %s14 = ssub.s32 %s9, 1
    %s15 = ssub.s32 %s9, 2
    %s22 = sadd.s32 1, %s17
    %p23 = scmp.ge.s32.totalorder %s22, 2
    %s24 = scalar_select %p23, 0, %s22
    %s25 = sadd.s32 1, %s16
    %s26 = scalar_select %p23, %s25, %s16
    %p27 = scmp.ge.s32.totalorder %s26, 1
    %s28 = scalar_select %p27, 0, %s26
    %s29 = ssub.s32 %s17, %s24
    %s30 = ssub.s32 %s16, %s28
    %s31 = sor.u32 %s29, %s30
    %p32 = scmp.eq.s32.totalorder %s31, 0
    %s34 = sadd.s32 %s33, 1
    %s35 = scalar_select %p32, %s33, %s34
    %p38 = pneg %p32
    %p39 = scmp.eq.s32.totalorder %s9, 1
    %p40 = por %p38, %p39
    %p41 = scmp.ne.s32.totalorder %s33, %s36
    %p42 = scmp.eq.s32.totalorder %s9, 0
    %p43 = por %p41, %p42
    %p44 = scmp.ne.s32.totalorder %s33, %s36
    %p45 = scmp.eq.s32.totalorder %s14, 1
    %p46 = por %p44, %p45
    %p47 = scmp.ne.s32.totalorder %s36, %s37
    %p48 = scmp.eq.s32.totalorder %s14, 0
    %p49 = por %p47, %p48
    %p50 = scmp.ne.s32.totalorder %s36, %s37
    %p51 = scmp.eq.s32.totalorder %s15, 1
    %p52 = por %p50, %p51
    %p54 = scmp.ne.s32.totalorder %s37, %s53
    %p55 = scmp.eq.s32.totalorder %s15, 0
    %p56 = por %p54, %p55
    %s57 = ssub.s32 %s16, %s28
    %p58 = scmp.eq.s32.totalorder %s57, 0
    %s60 = sadd.s32 %s59, 1
    %s61 = scalar_select %p58, %s59, %s60
    %p64 = pneg %p58
    %p65 = scmp.eq.s32.totalorder %s9, 1
    %p66 = por %p64, %p65
    %p67 = scmp.ne.s32.totalorder %s59, %s62
    %p68 = scmp.eq.s32.totalorder %s9, 0
    %p69 = por %p67, %p68
    %p70 = scmp.ne.s32.totalorder %s59, %s62
    %p71 = scmp.eq.s32.totalorder %s14, 1
    %p72 = por %p70, %p71
    %p73 = scmp.ne.s32.totalorder %s62, %s63
    %p74 = scmp.eq.s32.totalorder %s14, 0
    %p75 = por %p73, %p74
    %p76 = scmp.ne.s32.totalorder %s62, %s63
    %p77 = scmp.eq.s32.totalorder %s15, 1
    %p78 = por %p76, %p77
    %p80 = scmp.ne.s32.totalorder %s63, %s79
    %p81 = scmp.eq.s32.totalorder %s15, 0
    %p82 = por %p80, %p81
    %s83 = ssub.s32 %s16, %s28
    %p84 = scmp.eq.s32.totalorder %s83, 0
    %s86 = sadd.s32 %s85, 1
    %s87 = scalar_select %p84, %s85, %s86
    %p90 = pneg %p84
    %p91 = scmp.eq.s32.totalorder %s9, 1
    %p92 = por %p90, %p91
    %p93 = scmp.ne.s32.totalorder %s85, %s88
    %p94 = scmp.eq.s32.totalorder %s9, 0
    %p95 = por %p93, %p94
    %p96 = scmp.ne.s32.totalorder %s85, %s88
    %p97 = scmp.eq.s32.totalorder %s14, 1
    %p98 = por %p96, %p97
    %p99 = scmp.ne.s32.totalorder %s88, %s89
    %p100 = scmp.eq.s32.totalorder %s14, 0
    %p101 = por %p99, %p100
    %p102 = scmp.ne.s32.totalorder %s88, %s89
    %p103 = scmp.eq.s32.totalorder %s15, 1
    %p104 = por %p102, %p103
    %p106 = scmp.ne.s32.totalorder %s89, %s105
    %p107 = scmp.eq.s32.totalorder %s15, 0
    %p108 = por %p106, %p107
    %s109 = ssub.s32 %s17, %s24
    %s110 = ssub.s32 %s16, %s28
    %s111 = sor.u32 %s109, %s110
    %p112 = scmp.eq.s32.totalorder %s111, 0
    %s114 = sadd.s32 %s113, 1
    %s115 = scalar_select %p112, %s113, %s114
    %p118 = pneg %p112
    %p119 = scmp.eq.s32.totalorder %s9, 1
    %p120 = por %p118, %p119
    %p121 = scmp.ne.s32.totalorder %s113, %s116
    %p122 = scmp.eq.s32.totalorder %s9, 0
    %p123 = por %p121, %p122
    %p124 = scmp.ne.s32.totalorder %s113, %s116
    %p125 = scmp.eq.s32.totalorder %s14, 1
    %p126 = por %p124, %p125
    %p127 = scmp.ne.s32.totalorder %s116, %s117
    %p128 = scmp.eq.s32.totalorder %s14, 0
    %p129 = por %p127, %p128
    %p130 = scmp.ne.s32.totalorder %s116, %s117
    %p131 = scmp.eq.s32.totalorder %s15, 1
    %p132 = por %p130, %p131
    %p134 = scmp.ne.s32.totalorder %s117, %s133
    %p135 = scmp.eq.s32.totalorder %s15, 0
    %p136 = por %p134, %p135
    %p137 = scmp.le.s32.totalorder 1, %s9
    %p138 = scmp.lt.s32.totalorder %s9, 3
    %p139 = pnand %p137, %p138
    %p140 = pneg %p139
    // Predicated region
    $region9: #{group_norm_pallas.1} parent=5 // pred_check
      _
    $region10: #{group_norm_pallas.1} parent=5 // pred_check_branch
      %142 = sbr.rel (%p139) target = $region12
    $region11: #{group_norm_pallas.1} parent=5 // pred_region
      %s143 = ssub.s32 %s9, 1
      // Predicated region
      $region13: #{group_norm_pallas.1} parent=11 // pred_check
        %p144 = pneg %p75
      $region14: #{group_norm_pallas.1} parent=11 // pred_check_branch
        %146 = sbr.rel (%p144) target = $region16
      $region15: #{group_norm_pallas.1} parent=11 // pred_region
        %s147 = smul.u32 32, %s18
        %p148 = scmp.lt.s32.totalorder %s147, 31
        %s149 = scalar_select %p148, %s147, 31
        %s150 = smul.addr %s149, 4
        %s151 = scalar_lea.vmem %s1, %s150
        %s152 = smul.u32 32, %s18
      $region16: #{group_norm_pallas.1} parent=11 // pred_fallthru
        _
      // Predicated region
      $region17: #{group_norm_pallas.1} parent=11 // pred_check
        %p153 = pneg %p101
      $region18: #{group_norm_pallas.1} parent=11 // pred_check_branch
        %155 = sbr.rel (%p153) target = $region20
      $region19: #{group_norm_pallas.1} parent=11 // pred_region
        %s156 = smul.u32 32, %s18
        %p157 = scmp.lt.s32.totalorder %s156, 31
        %s158 = scalar_select %p157, %s156, 31
        %s159 = smul.addr %s158, 4
        %s160 = scalar_lea.vmem %s2, %s159
        %s161 = smul.u32 32, %s18
      $region20: #{group_norm_pallas.1} parent=11 // pred_fallthru
        _
    $region12: #{group_norm_pallas.1} parent=5 // pred_fallthru
      _
    %p162 = scmp.lt.s32.totalorder %s9, 2
    // Predicated region
    $region21: #{group_norm_pallas.1} parent=5 // pred_check
      %p163 = pneg %p162
    $region22: #{group_norm_pallas.1} parent=5 // pred_check_branch
      %165 = sbr.rel (%p163) target = $region24
    $region23: #{group_norm_pallas.1} parent=5 // pred_region
      // Predicated region
      $region25: #{group_norm_pallas.1} parent=23 // pred_check
        %p166 = pneg %p43
      $region26: #{group_norm_pallas.1} parent=23 // pred_check_branch
        %168 = sbr.rel (%p166) target = $region28
      $region27: #{group_norm_pallas.1} parent=23 // pred_region
        %s169 = smul.u32 32, %s16
        %p170 = scmp.lt.s32.totalorder %s17, 1
        %s171 = scalar_select %p170, %s17, 1
        %p172 = scmp.lt.s32.totalorder %s169, 31
        %s173 = scalar_select %p172, %s169, 31
        %s174 = smul.addr %s171, 32
        %s175 = sadd.s32 %s173, %s174
        %s176 = smul.addr %s175, 4
        %s177 = scalar_lea.vmem %s0, %s176
        %s178 = smul.u32 32, %s16
      $region28: #{group_norm_pallas.1} parent=23 // pred_fallthru
        _
    $region24: #{group_norm_pallas.1} parent=5 // pred_fallthru
      _
    %p179 = scmp.le.s32.totalorder 1, %s9
    %p180 = scmp.lt.s32.totalorder %s9, 3
    %p181 = pnand %p179, %p180
    %p182 = pneg %p181
    // Predicated region
    $region29: #{group_norm_pallas.1} parent=5 // pred_check
      _
    $region30: #{group_norm_pallas.1} parent=5 // pred_check_branch
      %184 = sbr.rel (%p181) target = $region32
    $region31: #{group_norm_pallas.1} parent=5 // pred_region
      %s185 = ssub.s32 %s9, 1
      %s186 = smul.u32 32, %s18
      %p187 = scmp.lt.s32.totalorder %s19, 1
      %s188 = scalar_select %p187, %s19, 1
      %p189 = scmp.lt.s32.totalorder %s186, 31
      %s190 = scalar_select %p189, %s186, 31
      %s191 = smul.addr %s188, 32
      %s192 = sadd.s32 %s190, %s191
      %s193 = smul.addr %s192, 4
      %s194 = scalar_lea.vmem %s0, %s193
      %p195 = pneg %p49
      %p196 = pneg %p46
      %s197 = smul.u32 32, %s18
      %p198 = scmp.lt.s32.totalorder %s197, 31
      %s199 = scalar_select %p198, %s197, 31
      %s200 = smul.addr %s199, 4
      %s201 = scalar_lea.vmem %s1, %s200
      %p202 = pneg %p75
      %p203 = pneg %p72
      %s204 = smul.u32 32, %s18
      %p205 = scmp.lt.s32.totalorder %s204, 31
      %s206 = scalar_select %p205, %s204, 31
      %s207 = smul.addr %s206, 4
      %s208 = scalar_lea.vmem %s2, %s207
      %p209 = pneg %p101
      %p210 = pneg %p98
      %p211 = pneg %p129
      %p212 = pneg %p126
      %s213 = smul.u32 32, %s18
      %p214 = scmp.lt.s32.totalorder %s19, 1
      %s215 = scalar_select %p214, %s19, 1
      %p216 = scmp.lt.s32.totalorder %s213, 31
      %s217 = scalar_select %p216, %s213, 31
      %s218 = smul.addr %s215, 32
      %s219 = sadd.s32 %s217, %s218
      %s220 = smul.addr %s219, 4
      %s221 = scalar_lea.vmem %s3, %s220
      %s222 = smul.u32 32, %s18
      %p223 = scmp.lt.s32.totalorder %s19, 1
      %s224 = scalar_select %p223, %s19, 1
      %p225 = scmp.lt.s32.totalorder %s222, 31
      %s226 = scalar_select %p225, %s222, 31
      %s227 = smul.addr %s224, 32
      %s228 = sadd.s32 %s226, %s227
      %s229 = smul.addr %s228, 4
      %s230 = scalar_lea.vmem %s0, %s229
      %s231 = smul.u32 32, %s18
      %s232 = smul.u32 32, %s18
      %p233 = scmp.lt.s32.totalorder %s232, 31
      %s234 = scalar_select %p233, %s232, 31
      %s235 = smul.addr %s234, 4
      %s236 = scalar_lea.vmem %s1, %s235
      %s237 = smul.u32 32, %s18
      %s238 = smul.u32 32, %s18
      %p239 = scmp.lt.s32.totalorder %s238, 31
      %s240 = scalar_select %p239, %s238, 31
      %s241 = smul.addr %s240, 4
      %s242 = scalar_lea.vmem %s2, %s241
      %s243 = smul.u32 32, %s18
      %s244 = smul.u32 32, %s18
      %p245 = scmp.lt.s32.totalorder %s19, 1
      %s246 = scalar_select %p245, %s19, 1
      %p247 = scmp.lt.s32.totalorder %s244, 31
      %s248 = scalar_select %p247, %s244, 31
      %s249 = smul.addr %s246, 32
      %s250 = sadd.s32 %s248, %s249
      %s251 = smul.addr %s250, 4
      %s252 = scalar_lea.vmem %s3, %s251
      %s253 = smul.u32 32, %s18
      %v254 = vld [vmem:[%s230] sm:$0xf]
      %v255 = vld [vmem:[%s230 + $0x4] sm:$0xf]
      %v256 = vld [vmem:[%s230 + $0x8] sm:$0xf]
      %v257 = vld [vmem:[%s230 + $0xc] sm:$0xf]
      %v258 = vld [vmem:[%s230 + $0x10] sm:$0xf]
      %v259 = vld [vmem:[%s230 + $0x14] sm:$0xf]
      %v260 = vld [vmem:[%s230 + $0x18] sm:$0xf]
      %v261 = vld [vmem:[%s230 + $0x1c] sm:$0xf]
      %v262 = vld [vmem:[%s230 + $0x20] sm:$0xf]
      %v263 = vld [vmem:[%s230 + $0x24] sm:$0xf]
      %v264 = vld [vmem:[%s230 + $0x28] sm:$0xf]
      %v265 = vld [vmem:[%s230 + $0x2c] sm:$0xf]
      %v266 = vld [vmem:[%s230 + $0x30] sm:$0xf]
      %v267 = vld [vmem:[%s230 + $0x34] sm:$0xf]
      %v268 = vld [vmem:[%s230 + $0x38] sm:$0xf]
      %v269 = vld [vmem:[%s230 + $0x3c] sm:$0xf]
      %v270 = vld [vmem:[%s230 + $0x40] sm:$0xf]
      %v271 = vld [vmem:[%s230 + $0x44] sm:$0xf]
      %v272 = vld [vmem:[%s230 + $0x48] sm:$0xf]
      %v273 = vld [vmem:[%s230 + $0x4c] sm:$0xf]
      %v274 = vld [vmem:[%s230 + $0x50] sm:$0xf]
      %v275 = vld [vmem:[%s230 + $0x54] sm:$0xf]
      %v276 = vld [vmem:[%s230 + $0x58] sm:$0xf]
      %v277 = vld [vmem:[%s230 + $0x5c] sm:$0xf]
      %v278 = vld [vmem:[%s230 + $0x60] sm:$0xf]
      %v279 = vld [vmem:[%s230 + $0x64] sm:$0xf]
      %v280 = vld [vmem:[%s230 + $0x68] sm:$0xf]
      %v281 = vld [vmem:[%s230 + $0x6c] sm:$0xf]
      %v282 = vld [vmem:[%s230 + $0x70] sm:$0xf]
      %v283 = vld [vmem:[%s230 + $0x74] sm:$0xf]
      %v284 = vld [vmem:[%s230 + $0x78] sm:$0xf]
      %v285 = vld [vmem:[%s230 + $0x7c] sm:$0xf]
      %vm286 = vcmask 1043456
      %v287 = vsel %vm286, %v254, 0.0
      %288 = vadd.xlane.f32.xlu0 %v287
      %v289 = vpop.xlane.xlu0 %288
      %v290 = vsel %vm286, %v255, 0.0
      %291 = vadd.xlane.f32.xlu0 %v290
      %v292 = vpop.xlane.xlu0 %291
      %v293 = vsel %vm286, %v256, 0.0
      %294 = vadd.xlane.f32.xlu0 %v293
      %v295 = vpop.xlane.xlu0 %294
      %v296 = vsel %vm286, %v257, 0.0
      %297 = vadd.xlane.f32.xlu0 %v296
      %v298 = vpop.xlane.xlu0 %297
      %v299 = vsel %vm286, %v258, 0.0
      %300 = vadd.xlane.f32.xlu0 %v299
      %v301 = vpop.xlane.xlu0 %300
      %v302 = vsel %vm286, %v259, 0.0
      %303 = vadd.xlane.f32.xlu0 %v302
      %v304 = vpop.xlane.xlu0 %303
      %v305 = vsel %vm286, %v260, 0.0
      %306 = vadd.xlane.f32.xlu0 %v305
      %v307 = vpop.xlane.xlu0 %306
      %v308 = vsel %vm286, %v261, 0.0
      %309 = vadd.xlane.f32.xlu0 %v308
      %v310 = vpop.xlane.xlu0 %309
      %v311 = vsel %vm286, %v262, 0.0
      %312 = vadd.xlane.f32.xlu0 %v311
      %v313 = vpop.xlane.xlu0 %312
      %v314 = vsel %vm286, %v263, 0.0
      %315 = vadd.xlane.f32.xlu0 %v314
      %v316 = vpop.xlane.xlu0 %315
      %v317 = vsel %vm286, %v264, 0.0
      %318 = vadd.xlane.f32.xlu0 %v317
      %v319 = vpop.xlane.xlu0 %318
      %v320 = vsel %vm286, %v265, 0.0
      %321 = vadd.xlane.f32.xlu0 %v320
      %v322 = vpop.xlane.xlu0 %321
      %v323 = vsel %vm286, %v266, 0.0
      %324 = vadd.xlane.f32.xlu0 %v323
      %v325 = vpop.xlane.xlu0 %324
      %v326 = vsel %vm286, %v267, 0.0
      %327 = vadd.xlane.f32.xlu0 %v326
      %v328 = vpop.xlane.xlu0 %327
      %v329 = vsel %vm286, %v268, 0.0
      %330 = vadd.xlane.f32.xlu0 %v329
      %v331 = vpop.xlane.xlu0 %330
      %v332 = vsel %vm286, %v269, 0.0
      %333 = vadd.xlane.f32.xlu0 %v332
      %v334 = vpop.xlane.xlu0 %333
      %v335 = vsel %vm286, %v270, 0.0
      %336 = vadd.xlane.f32.xlu0 %v335
      %v337 = vpop.xlane.xlu0 %336
      %v338 = vsel %vm286, %v271, 0.0
      %339 = vadd.xlane.f32.xlu0 %v338
      %v340 = vpop.xlane.xlu0 %339
      %v341 = vsel %vm286, %v272, 0.0
      %342 = vadd.xlane.f32.xlu0 %v341
      %v343 = vpop.xlane.xlu0 %342
      %v344 = vsel %vm286, %v273, 0.0
      %345 = vadd.xlane.f32.xlu0 %v344
      %v346 = vpop.xlane.xlu0 %345
      %v347 = vsel %vm286, %v274, 0.0
      %348 = vadd.xlane.f32.xlu0 %v347
      %v349 = vpop.xlane.xlu0 %348
      %v350 = vsel %vm286, %v275, 0.0
      %351 = vadd.xlane.f32.xlu0 %v350
      %v352 = vpop.xlane.xlu0 %351
      %v353 = vsel %vm286, %v276, 0.0
      %354 = vadd.xlane.f32.xlu0 %v353
      %v355 = vpop.xlane.xlu0 %354
      %v356 = vsel %vm286, %v277, 0.0
      %357 = vadd.xlane.f32.xlu0 %v356
      %v358 = vpop.xlane.xlu0 %357
      %v359 = vsel %vm286, %v278, 0.0
      %360 = vadd.xlane.f32.xlu0 %v359
      %v361 = vpop.xlane.xlu0 %360
      %v362 = vsel %vm286, %v279, 0.0
      %363 = vadd.xlane.f32.xlu0 %v362
      %v364 = vpop.xlane.xlu0 %363
      %v365 = vsel %vm286, %v280, 0.0
      %366 = vadd.xlane.f32.xlu0 %v365
      %v367 = vpop.xlane.xlu0 %366
      %v368 = vsel %vm286, %v281, 0.0
      %369 = vadd.xlane.f32.xlu0 %v368
      %v370 = vpop.xlane.xlu0 %369
      %v371 = vsel %vm286, %v282, 0.0
      %372 = vadd.xlane.f32.xlu0 %v371
      %v373 = vpop.xlane.xlu0 %372
      %v374 = vsel %vm286, %v283, 0.0
      %375 = vadd.xlane.f32.xlu0 %v374
      %v376 = vpop.xlane.xlu0 %375
      %v377 = vsel %vm286, %v284, 0.0
      %378 = vadd.xlane.f32.xlu0 %v377
      %v379 = vpop.xlane.xlu0 %378
      %v380 = vsel %vm286, %v285, 0.0
      %381 = vadd.xlane.f32.xlu0 %v380
      %v382 = vpop.xlane.xlu0 %381
      %v383 = vsel %vm286, %v289, 0.0
      %v384 = vrot.slane %v383, 4
      %v385 = vadd.f32 %v383, %v384
      %v386 = vrot.slane %v385, 2
      %v387 = vadd.f32 %v385, %v386
      %v388 = vrot.slane %v387, 1
      %v389 = vadd.f32 %v387, %v388
      %v390 = vsel %vm286, %v292, 0.0
      %v391 = vrot.slane %v390, 4
      %v392 = vadd.f32 %v390, %v391
      %v393 = vrot.slane %v392, 2
      %v394 = vadd.f32 %v392, %v393
      %v395 = vrot.slane %v394, 1
      %v396 = vadd.f32 %v394, %v395
      %v397 = vsel %vm286, %v295, 0.0
      %v398 = vrot.slane %v397, 4
      %v399 = vadd.f32 %v397, %v398
      %v400 = vrot.slane %v399, 2
      %v401 = vadd.f32 %v399, %v400
      %v402 = vrot.slane %v401, 1
      %v403 = vadd.f32 %v401, %v402
      %v404 = vsel %vm286, %v298, 0.0
      %v405 = vrot.slane %v404, 4
      %v406 = vadd.f32 %v404, %v405
      %v407 = vrot.slane %v406, 2
      %v408 = vadd.f32 %v406, %v407
      %v409 = vrot.slane %v408, 1
      %v410 = vadd.f32 %v408, %v409
      %v411 = vsel %vm286, %v301, 0.0
      %v412 = vrot.slane %v411, 4
      %v413 = vadd.f32 %v411, %v412
      %v414 = vrot.slane %v413, 2
      %v415 = vadd.f32 %v413, %v414
      %v416 = vrot.slane %v415, 1
      %v417 = vadd.f32 %v415, %v416
      %v418 = vsel %vm286, %v304, 0.0
      %v419 = vrot.slane %v418, 4
      %v420 = vadd.f32 %v418, %v419
      %v421 = vrot.slane %v420, 2
      %v422 = vadd.f32 %v420, %v421
      %v423 = vrot.slane %v422, 1
      %v424 = vadd.f32 %v422, %v423
      %v425 = vsel %vm286, %v307, 0.0
      %v426 = vrot.slane %v425, 4
      %v427 = vadd.f32 %v425, %v426
      %v428 = vrot.slane %v427, 2
      %v429 = vadd.f32 %v427, %v428
      %v430 = vrot.slane %v429, 1
      %v431 = vadd.f32 %v429, %v430
      %v432 = vsel %vm286, %v310, 0.0
      %v433 = vrot.slane %v432, 4
      %v434 = vadd.f32 %v432, %v433
      %v435 = vrot.slane %v434, 2
      %v436 = vadd.f32 %v434, %v435
      %v437 = vrot.slane %v436, 1
      %v438 = vadd.f32 %v436, %v437
      %v439 = vsel %vm286, %v313, 0.0
      %v440 = vrot.slane %v439, 4
      %v441 = vadd.f32 %v439, %v440
      %v442 = vrot.slane %v441, 2
      %v443 = vadd.f32 %v441, %v442
      %v444 = vrot.slane %v443, 1
      %v445 = vadd.f32 %v443, %v444
      %v446 = vsel %vm286, %v316, 0.0
      %v447 = vrot.slane %v446, 4
      %v448 = vadd.f32 %v446, %v447
      %v449 = vrot.slane %v448, 2
      %v450 = vadd.f32 %v448, %v449
      %v451 = vrot.slane %v450, 1
      %v452 = vadd.f32 %v450, %v451
      %v453 = vsel %vm286, %v319, 0.0
      %v454 = vrot.slane %v453, 4
      %v455 = vadd.f32 %v453, %v454
      %v456 = vrot.slane %v455, 2
      %v457 = vadd.f32 %v455, %v456
      %v458 = vrot.slane %v457, 1
      %v459 = vadd.f32 %v457, %v458
      %v460 = vsel %vm286, %v322, 0.0
      %v461 = vrot.slane %v460, 4
      %v462 = vadd.f32 %v460, %v461
      %v463 = vrot.slane %v462, 2
      %v464 = vadd.f32 %v462, %v463
      %v465 = vrot.slane %v464, 1
      %v466 = vadd.f32 %v464, %v465
      %v467 = vsel %vm286, %v325, 0.0
      %v468 = vrot.slane %v467, 4
      %v469 = vadd.f32 %v467, %v468
      %v470 = vrot.slane %v469, 2
      %v471 = vadd.f32 %v469, %v470
      %v472 = vrot.slane %v471, 1
      %v473 = vadd.f32 %v471, %v472
      %v474 = vsel %vm286, %v328, 0.0
      %v475 = vrot.slane %v474, 4
      %v476 = vadd.f32 %v474, %v475
      %v477 = vrot.slane %v476, 2
      %v478 = vadd.f32 %v476, %v477
      %v479 = vrot.slane %v478, 1
      %v480 = vadd.f32 %v478, %v479
      %v481 = vsel %vm286, %v331, 0.0
      %v482 = vrot.slane %v481, 4
      %v483 = vadd.f32 %v481, %v482
      %v484 = vrot.slane %v483, 2
      %v485 = vadd.f32 %v483, %v484
      %v486 = vrot.slane %v485, 1
      %v487 = vadd.f32 %v485, %v486
      %v488 = vsel %vm286, %v334, 0.0
      %v489 = vrot.slane %v488, 4
      %v490 = vadd.f32 %v488, %v489
      %v491 = vrot.slane %v490, 2
      %v492 = vadd.f32 %v490, %v491
      %v493 = vrot.slane %v492, 1
      %v494 = vadd.f32 %v492, %v493
      %v495 = vsel %vm286, %v337, 0.0
      %v496 = vrot.slane %v495, 4
      %v497 = vadd.f32 %v495, %v496
      %v498 = vrot.slane %v497, 2
      %v499 = vadd.f32 %v497, %v498
      %v500 = vrot.slane %v499, 1
      %v501 = vadd.f32 %v499, %v500
      %v502 = vsel %vm286, %v340, 0.0
      %v503 = vrot.slane %v502, 4
      %v504 = vadd.f32 %v502, %v503
      %v505 = vrot.slane %v504, 2
      %v506 = vadd.f32 %v504, %v505
      %v507 = vrot.slane %v506, 1
      %v508 = vadd.f32 %v506, %v507
      %v509 = vsel %vm286, %v343, 0.0
      %v510 = vrot.slane %v509, 4
      %v511 = vadd.f32 %v509, %v510
      %v512 = vrot.slane %v511, 2
      %v513 = vadd.f32 %v511, %v512
      %v514 = vrot.slane %v513, 1
      %v515 = vadd.f32 %v513, %v514
      %v516 = vsel %vm286, %v346, 0.0
      %v517 = vrot.slane %v516, 4
      %v518 = vadd.f32 %v516, %v517
      %v519 = vrot.slane %v518, 2
      %v520 = vadd.f32 %v518, %v519
      %v521 = vrot.slane %v520, 1
      %v522 = vadd.f32 %v520, %v521
      %v523 = vsel %vm286, %v349, 0.0
      %v524 = vrot.slane %v523, 4
      %v525 = vadd.f32 %v523, %v524
      %v526 = vrot.slane %v525, 2
      %v527 = vadd.f32 %v525, %v526
      %v528 = vrot.slane %v527, 1
      %v529 = vadd.f32 %v527, %v528
      %v530 = vsel %vm286, %v352, 0.0
      %v531 = vrot.slane %v530, 4
      %v532 = vadd.f32 %v530, %v531
      %v533 = vrot.slane %v532, 2
      %v534 = vadd.f32 %v532, %v533
      %v535 = vrot.slane %v534, 1
      %v536 = vadd.f32 %v534, %v535
      %v537 = vsel %vm286, %v355, 0.0
      %v538 = vrot.slane %v537, 4
      %v539 = vadd.f32 %v537, %v538
      %v540 = vrot.slane %v539, 2
      %v541 = vadd.f32 %v539, %v540
      %v542 = vrot.slane %v541, 1
      %v543 = vadd.f32 %v541, %v542
      %v544 = vsel %vm286, %v358, 0.0
      %v545 = vrot.slane %v544, 4
      %v546 = vadd.f32 %v544, %v545
      %v547 = vrot.slane %v546, 2
      %v548 = vadd.f32 %v546, %v547
      %v549 = vrot.slane %v548, 1
      %v550 = vadd.f32 %v548, %v549
      %v551 = vsel %vm286, %v361, 0.0
      %v552 = vrot.slane %v551, 4
      %v553 = vadd.f32 %v551, %v552
      %v554 = vrot.slane %v553, 2
      %v555 = vadd.f32 %v553, %v554
      %v556 = vrot.slane %v555, 1
      %v557 = vadd.f32 %v555, %v556
      %v558 = vsel %vm286, %v364, 0.0
      %v559 = vrot.slane %v558, 4
      %v560 = vadd.f32 %v558, %v559
      %v561 = vrot.slane %v560, 2
      %v562 = vadd.f32 %v560, %v561
      %v563 = vrot.slane %v562, 1
      %v564 = vadd.f32 %v562, %v563
      %v565 = vsel %vm286, %v367, 0.0
      %v566 = vrot.slane %v565, 4
      %v567 = vadd.f32 %v565, %v566
      %v568 = vrot.slane %v567, 2
      %v569 = vadd.f32 %v567, %v568
      %v570 = vrot.slane %v569, 1
      %v571 = vadd.f32 %v569, %v570
      %v572 = vsel %vm286, %v370, 0.0
      %v573 = vrot.slane %v572, 4
      %v574 = vadd.f32 %v572, %v573
      %v575 = vrot.slane %v574, 2
      %v576 = vadd.f32 %v574, %v575
      %v577 = vrot.slane %v576, 1
      %v578 = vadd.f32 %v576, %v577
      %v579 = vsel %vm286, %v373, 0.0
      %v580 = vrot.slane %v579, 4
      %v581 = vadd.f32 %v579, %v580
      %v582 = vrot.slane %v581, 2
      %v583 = vadd.f32 %v581, %v582
      %v584 = vrot.slane %v583, 1
      %v585 = vadd.f32 %v583, %v584
      %v586 = vsel %vm286, %v376, 0.0
      %v587 = vrot.slane %v586, 4
      %v588 = vadd.f32 %v586, %v587
      %v589 = vrot.slane %v588, 2
      %v590 = vadd.f32 %v588, %v589
      %v591 = vrot.slane %v590, 1
      %v592 = vadd.f32 %v590, %v591
      %v593 = vsel %vm286, %v379, 0.0
      %v594 = vrot.slane %v593, 4
      %v595 = vadd.f32 %v593, %v594
      %v596 = vrot.slane %v595, 2
      %v597 = vadd.f32 %v595, %v596
      %v598 = vrot.slane %v597, 1
      %v599 = vadd.f32 %v597, %v598
      %v600 = vsel %vm286, %v382, 0.0
      %v601 = vrot.slane %v600, 4
      %v602 = vadd.f32 %v600, %v601
      %v603 = vrot.slane %v602, 2
      %v604 = vadd.f32 %v602, %v603
      %v605 = vrot.slane %v604, 1
      %v606 = vadd.f32 %v604, %v605
      %v607 = vmul.f32 %v389, 0.001953125
      %v608 = vmul.f32 %v396, 0.001953125
      %v609 = vmul.f32 %v403, 0.001953125
      %v610 = vmul.f32 %v410, 0.001953125
      %v611 = vmul.f32 %v417, 0.001953125
      %v612 = vmul.f32 %v424, 0.001953125
      %v613 = vmul.f32 %v431, 0.001953125
      %v614 = vmul.f32 %v438, 0.001953125
      %v615 = vmul.f32 %v445, 0.001953125
      %v616 = vmul.f32 %v452, 0.001953125
      %v617 = vmul.f32 %v459, 0.001953125
      %v618 = vmul.f32 %v466, 0.001953125
      %v619 = vmul.f32 %v473, 0.001953125
      %v620 = vmul.f32 %v480, 0.001953125
      %v621 = vmul.f32 %v487, 0.001953125
      %v622 = vmul.f32 %v494, 0.001953125
      %v623 = vmul.f32 %v501, 0.001953125
      %v624 = vmul.f32 %v508, 0.001953125
      %v625 = vmul.f32 %v515, 0.001953125
      %v626 = vmul.f32 %v522, 0.001953125
      %v627 = vmul.f32 %v529, 0.001953125
      %v628 = vmul.f32 %v536, 0.001953125
      %v629 = vmul.f32 %v543, 0.001953125
      %v630 = vmul.f32 %v550, 0.001953125
      %v631 = vmul.f32 %v557, 0.001953125
      %v632 = vmul.f32 %v564, 0.001953125
      %v633 = vmul.f32 %v571, 0.001953125
      %v634 = vmul.f32 %v578, 0.001953125
      %v635 = vmul.f32 %v585, 0.001953125
      %v636 = vmul.f32 %v592, 0.001953125
      %v637 = vmul.f32 %v599, 0.001953125
      %v638 = vmul.f32 %v606, 0.001953125
      %v639 = vsub.f32 %v254, %v607
      %v640 = vsub.f32 %v255, %v608
      %v641 = vsub.f32 %v256, %v609
      %v642 = vsub.f32 %v257, %v610
      %v643 = vsub.f32 %v258, %v611
      %v644 = vsub.f32 %v259, %v612
      %v645 = vsub.f32 %v260, %v613
      %v646 = vsub.f32 %v261, %v614
      %v647 = vsub.f32 %v262, %v615
      %v648 = vsub.f32 %v263, %v616
      %v649 = vsub.f32 %v264, %v617
      %v650 = vsub.f32 %v265, %v618
      %v651 = vsub.f32 %v266, %v619
      %v652 = vsub.f32 %v267, %v620
      %v653 = vsub.f32 %v268, %v621
      %v654 = vsub.f32 %v269, %v622
      %v655 = vsub.f32 %v270, %v623
      %v656 = vsub.f32 %v271, %v624
      %v657 = vsub.f32 %v272, %v625
      %v658 = vsub.f32 %v273, %v626
      %v659 = vsub.f32 %v274, %v627
      %v660 = vsub.f32 %v275, %v628
      %v661 = vsub.f32 %v276, %v629
      %v662 = vsub.f32 %v277, %v630
      %v663 = vsub.f32 %v278, %v631
      %v664 = vsub.f32 %v279, %v632
      %v665 = vsub.f32 %v280, %v633
      %v666 = vsub.f32 %v281, %v634
      %v667 = vsub.f32 %v282, %v635
      %v668 = vsub.f32 %v283, %v636
      %v669 = vsub.f32 %v284, %v637
      %v670 = vsub.f32 %v285, %v638
      %v671 = vmul.f32 %v639, %v639
      %v672 = vmul.f32 %v640, %v640
      %v673 = vmul.f32 %v641, %v641
      %v674 = vmul.f32 %v642, %v642
      %v675 = vmul.f32 %v643, %v643
      %v676 = vmul.f32 %v644, %v644
      %v677 = vmul.f32 %v645, %v645
      %v678 = vmul.f32 %v646, %v646
      %v679 = vmul.f32 %v647, %v647
      %v680 = vmul.f32 %v648, %v648
      %v681 = vmul.f32 %v649, %v649
      %v682 = vmul.f32 %v650, %v650
      %v683 = vmul.f32 %v651, %v651
      %v684 = vmul.f32 %v652, %v652
      %v685 = vmul.f32 %v653, %v653
      %v686 = vmul.f32 %v654, %v654
      %v687 = vmul.f32 %v655, %v655
      %v688 = vmul.f32 %v656, %v656
      %v689 = vmul.f32 %v657, %v657
      %v690 = vmul.f32 %v658, %v658
      %v691 = vmul.f32 %v659, %v659
      %v692 = vmul.f32 %v660, %v660
      %v693 = vmul.f32 %v661, %v661
      %v694 = vmul.f32 %v662, %v662
      %v695 = vmul.f32 %v663, %v663
      %v696 = vmul.f32 %v664, %v664
      %v697 = vmul.f32 %v665, %v665
      %v698 = vmul.f32 %v666, %v666
      %v699 = vmul.f32 %v667, %v667
      %v700 = vmul.f32 %v668, %v668
      %v701 = vmul.f32 %v669, %v669
      %v702 = vmul.f32 %v670, %v670
      %v703 = vsel %vm286, %v671, 0.0
      %704 = vadd.xlane.f32.xlu0 %v703
      %v705 = vpop.xlane.xlu0 %704
      %v706 = vsel %vm286, %v672, 0.0
      %707 = vadd.xlane.f32.xlu0 %v706
      %v708 = vpop.xlane.xlu0 %707
      %v709 = vsel %vm286, %v673, 0.0
      %710 = vadd.xlane.f32.xlu0 %v709
      %v711 = vpop.xlane.xlu0 %710
      %v712 = vsel %vm286, %v674, 0.0
      %713 = vadd.xlane.f32.xlu0 %v712
      %v714 = vpop.xlane.xlu0 %713
      %v715 = vsel %vm286, %v675, 0.0
      %716 = vadd.xlane.f32.xlu0 %v715
      %v717 = vpop.xlane.xlu0 %716
      %v718 = vsel %vm286, %v676, 0.0
      %719 = vadd.xlane.f32.xlu0 %v718
      %v720 = vpop.xlane.xlu0 %719
      %v721 = vsel %vm286, %v677, 0.0
      %722 = vadd.xlane.f32.xlu0 %v721
      %v723 = vpop.xlane.xlu0 %722
      %v724 = vsel %vm286, %v678, 0.0
      %725 = vadd.xlane.f32.xlu0 %v724
      %v726 = vpop.xlane.xlu0 %725
      %v727 = vsel %vm286, %v679, 0.0
      %728 = vadd.xlane.f32.xlu0 %v727
      %v729 = vpop.xlane.xlu0 %728
      %v730 = vsel %vm286, %v680, 0.0
      %731 = vadd.xlane.f32.xlu0 %v730
      %v732 = vpop.xlane.xlu0 %731
      %v733 = vsel %vm286, %v681, 0.0
      %734 = vadd.xlane.f32.xlu0 %v733
      %v735 = vpop.xlane.xlu0 %734
      %v736 = vsel %vm286, %v682, 0.0
      %737 = vadd.xlane.f32.xlu0 %v736
      %v738 = vpop.xlane.xlu0 %737
      %v739 = vsel %vm286, %v683, 0.0
      %740 = vadd.xlane.f32.xlu0 %v739
      %v741 = vpop.xlane.xlu0 %740
      %v742 = vsel %vm286, %v684, 0.0
      %743 = vadd.xlane.f32.xlu0 %v742
      %v744 = vpop.xlane.xlu0 %743
      %v745 = vsel %vm286, %v685, 0.0
      %746 = vadd.xlane.f32.xlu0 %v745
      %v747 = vpop.xlane.xlu0 %746
      %v748 = vsel %vm286, %v686, 0.0
      %749 = vadd.xlane.f32.xlu0 %v748
      %v750 = vpop.xlane.xlu0 %749
      %v751 = vsel %vm286, %v687, 0.0
      %752 = vadd.xlane.f32.xlu0 %v751
      %v753 = vpop.xlane.xlu0 %752
      %v754 = vsel %vm286, %v688, 0.0
      %755 = vadd.xlane.f32.xlu0 %v754
      %v756 = vpop.xlane.xlu0 %755
      %v757 = vsel %vm286, %v689, 0.0
      %758 = vadd.xlane.f32.xlu0 %v757
      %v759 = vpop.xlane.xlu0 %758
      %v760 = vsel %vm286, %v690, 0.0
      %761 = vadd.xlane.f32.xlu0 %v760
      %v762 = vpop.xlane.xlu0 %761
      %v763 = vsel %vm286, %v691, 0.0
      %764 = vadd.xlane.f32.xlu0 %v763
      %v765 = vpop.xlane.xlu0 %764
      %v766 = vsel %vm286, %v692, 0.0
      %767 = vadd.xlane.f32.xlu0 %v766
      %v768 = vpop.xlane.xlu0 %767
      %v769 = vsel %vm286, %v693, 0.0
      %770 = vadd.xlane.f32.xlu0 %v769
      %v771 = vpop.xlane.xlu0 %770
      %v772 = vsel %vm286, %v694, 0.0
      %773 = vadd.xlane.f32.xlu0 %v772
      %v774 = vpop.xlane.xlu0 %773
      %v775 = vsel %vm286, %v695, 0.0
      %776 = vadd.xlane.f32.xlu0 %v775
      %v777 = vpop.xlane.xlu0 %776
      %v778 = vsel %vm286, %v696, 0.0
      %779 = vadd.xlane.f32.xlu0 %v778
      %v780 = vpop.xlane.xlu0 %779
      %v781 = vsel %vm286, %v697, 0.0
      %782 = vadd.xlane.f32.xlu0 %v781
      %v783 = vpop.xlane.xlu0 %782
      %v784 = vsel %vm286, %v698, 0.0
      %785 = vadd.xlane.f32.xlu0 %v784
      %v786 = vpop.xlane.xlu0 %785
      %v787 = vsel %vm286, %v699, 0.0
      %788 = vadd.xlane.f32.xlu0 %v787
      %v789 = vpop.xlane.xlu0 %788
      %v790 = vsel %vm286, %v700, 0.0
      %791 = vadd.xlane.f32.xlu0 %v790
      %v792 = vpop.xlane.xlu0 %791
      %v793 = vsel %vm286, %v701, 0.0
      %794 = vadd.xlane.f32.xlu0 %v793
      %v795 = vpop.xlane.xlu0 %794
      %v796 = vsel %vm286, %v702, 0.0
      %797 = vadd.xlane.f32.xlu0 %v796
      %v798 = vpop.xlane.xlu0 %797
      %v799 = vsel %vm286, %v705, 0.0
      %v800 = vrot.slane %v799, 4
      %v801 = vadd.f32 %v799, %v800
      %v802 = vrot.slane %v801, 2
      %v803 = vadd.f32 %v801, %v802
      %v804 = vrot.slane %v803, 1
      %v805 = vadd.f32 %v803, %v804
      %v806 = vsel %vm286, %v708, 0.0
      %v807 = vrot.slane %v806, 4
      %v808 = vadd.f32 %v806, %v807
      %v809 = vrot.slane %v808, 2
      %v810 = vadd.f32 %v808, %v809
      %v811 = vrot.slane %v810, 1
      %v812 = vadd.f32 %v810, %v811
      %v813 = vsel %vm286, %v711, 0.0
      %v814 = vrot.slane %v813, 4
      %v815 = vadd.f32 %v813, %v814
      %v816 = vrot.slane %v815, 2
      %v817 = vadd.f32 %v815, %v816
      %v818 = vrot.slane %v817, 1
      %v819 = vadd.f32 %v817, %v818
      %v820 = vsel %vm286, %v714, 0.0
      %v821 = vrot.slane %v820, 4
      %v822 = vadd.f32 %v820, %v821
      %v823 = vrot.slane %v822, 2
      %v824 = vadd.f32 %v822, %v823
      %v825 = vrot.slane %v824, 1
      %v826 = vadd.f32 %v824, %v825
      %v827 = vsel %vm286, %v717, 0.0
      %v828 = vrot.slane %v827, 4
      %v829 = vadd.f32 %v827, %v828
      %v830 = vrot.slane %v829, 2
      %v831 = vadd.f32 %v829, %v830
      %v832 = vrot.slane %v831, 1
      %v833 = vadd.f32 %v831, %v832
      %v834 = vsel %vm286, %v720, 0.0
      %v835 = vrot.slane %v834, 4
      %v836 = vadd.f32 %v834, %v835
      %v837 = vrot.slane %v836, 2
      %v838 = vadd.f32 %v836, %v837
      %v839 = vrot.slane %v838, 1
      %v840 = vadd.f32 %v838, %v839
      %v841 = vsel %vm286, %v723, 0.0
      %v842 = vrot.slane %v841, 4
      %v843 = vadd.f32 %v841, %v842
      %v844 = vrot.slane %v843, 2
      %v845 = vadd.f32 %v843, %v844
      %v846 = vrot.slane %v845, 1
      %v847 = vadd.f32 %v845, %v846
      %v848 = vsel %vm286, %v726, 0.0
      %v849 = vrot.slane %v848, 4
      %v850 = vadd.f32 %v848, %v849
      %v851 = vrot.slane %v850, 2
      %v852 = vadd.f32 %v850, %v851
      %v853 = vrot.slane %v852, 1
      %v854 = vadd.f32 %v852, %v853
      %v855 = vsel %vm286, %v729, 0.0
      %v856 = vrot.slane %v855, 4
      %v857 = vadd.f32 %v855, %v856
      %v858 = vrot.slane %v857, 2
      %v859 = vadd.f32 %v857, %v858
      %v860 = vrot.slane %v859, 1
      %v861 = vadd.f32 %v859, %v860
      %v862 = vsel %vm286, %v732, 0.0
      %v863 = vrot.slane %v862, 4
      %v864 = vadd.f32 %v862, %v863
      %v865 = vrot.slane %v864, 2
      %v866 = vadd.f32 %v864, %v865
      %v867 = vrot.slane %v866, 1
      %v868 = vadd.f32 %v866, %v867
      %v869 = vsel %vm286, %v735, 0.0
      %v870 = vrot.slane %v869, 4
      %v871 = vadd.f32 %v869, %v870
      %v872 = vrot.slane %v871, 2
      %v873 = vadd.f32 %v871, %v872
      %v874 = vrot.slane %v873, 1
      %v875 = vadd.f32 %v873, %v874
      %v876 = vsel %vm286, %v738, 0.0
      %v877 = vrot.slane %v876, 4
      %v878 = vadd.f32 %v876, %v877
      %v879 = vrot.slane %v878, 2
      %v880 = vadd.f32 %v878, %v879
      %v881 = vrot.slane %v880, 1
      %v882 = vadd.f32 %v880, %v881
      %v883 = vsel %vm286, %v741, 0.0
      %v884 = vrot.slane %v883, 4
      %v885 = vadd.f32 %v883, %v884
      %v886 = vrot.slane %v885, 2
      %v887 = vadd.f32 %v885, %v886
      %v888 = vrot.slane %v887, 1
      %v889 = vadd.f32 %v887, %v888
      %v890 = vsel %vm286, %v744, 0.0
      %v891 = vrot.slane %v890, 4
      %v892 = vadd.f32 %v890, %v891
      %v893 = vrot.slane %v892, 2
      %v894 = vadd.f32 %v892, %v893
      %v895 = vrot.slane %v894, 1
      %v896 = vadd.f32 %v894, %v895
      %v897 = vsel %vm286, %v747, 0.0
      %v898 = vrot.slane %v897, 4
      %v899 = vadd.f32 %v897, %v898
      %v900 = vrot.slane %v899, 2
      %v901 = vadd.f32 %v899, %v900
      %v902 = vrot.slane %v901, 1
      %v903 = vadd.f32 %v901, %v902
      %v904 = vsel %vm286, %v750, 0.0
      %v905 = vrot.slane %v904, 4
      %v906 = vadd.f32 %v904, %v905
      %v907 = vrot.slane %v906, 2
      %v908 = vadd.f32 %v906, %v907
      %v909 = vrot.slane %v908, 1
      %v910 = vadd.f32 %v908, %v909
      %v911 = vsel %vm286, %v753, 0.0
      %v912 = vrot.slane %v911, 4
      %v913 = vadd.f32 %v911, %v912
      %v914 = vrot.slane %v913, 2
      %v915 = vadd.f32 %v913, %v914
      %v916 = vrot.slane %v915, 1
      %v917 = vadd.f32 %v915, %v916
      %v918 = vsel %vm286, %v756, 0.0
      %v919 = vrot.slane %v918, 4
      %v920 = vadd.f32 %v918, %v919
      %v921 = vrot.slane %v920, 2
      %v922 = vadd.f32 %v920, %v921
      %v923 = vrot.slane %v922, 1
      %v924 = vadd.f32 %v922, %v923
      %v925 = vsel %vm286, %v759, 0.0
      %v926 = vrot.slane %v925, 4
      %v927 = vadd.f32 %v925, %v926
      %v928 = vrot.slane %v927, 2
      %v929 = vadd.f32 %v927, %v928
      %v930 = vrot.slane %v929, 1
      %v931 = vadd.f32 %v929, %v930
      %v932 = vsel %vm286, %v762, 0.0
      %v933 = vrot.slane %v932, 4
      %v934 = vadd.f32 %v932, %v933
      %v935 = vrot.slane %v934, 2
      %v936 = vadd.f32 %v934, %v935
      %v937 = vrot.slane %v936, 1
      %v938 = vadd.f32 %v936, %v937
      %v939 = vsel %vm286, %v765, 0.0
      %v940 = vrot.slane %v939, 4
      %v941 = vadd.f32 %v939, %v940
      %v942 = vrot.slane %v941, 2
      %v943 = vadd.f32 %v941, %v942
      %v944 = vrot.slane %v943, 1
      %v945 = vadd.f32 %v943, %v944
      %v946 = vsel %vm286, %v768, 0.0
      %v947 = vrot.slane %v946, 4
      %v948 = vadd.f32 %v946, %v947
      %v949 = vrot.slane %v948, 2
      %v950 = vadd.f32 %v948, %v949
      %v951 = vrot.slane %v950, 1
      %v952 = vadd.f32 %v950, %v951
      %v953 = vsel %vm286, %v771, 0.0
      %v954 = vrot.slane %v953, 4
      %v955 = vadd.f32 %v953, %v954
      %v956 = vrot.slane %v955, 2
      %v957 = vadd.f32 %v955, %v956
      %v958 = vrot.slane %v957, 1
      %v959 = vadd.f32 %v957, %v958
      %v960 = vsel %vm286, %v774, 0.0
      %v961 = vrot.slane %v960, 4
      %v962 = vadd.f32 %v960, %v961
      %v963 = vrot.slane %v962, 2
      %v964 = vadd.f32 %v962, %v963
      %v965 = vrot.slane %v964, 1
      %v966 = vadd.f32 %v964, %v965
      %v967 = vsel %vm286, %v777, 0.0
      %v968 = vrot.slane %v967, 4
      %v969 = vadd.f32 %v967, %v968
      %v970 = vrot.slane %v969, 2
      %v971 = vadd.f32 %v969, %v970
      %v972 = vrot.slane %v971, 1
      %v973 = vadd.f32 %v971, %v972
      %v974 = vsel %vm286, %v780, 0.0
      %v975 = vrot.slane %v974, 4
      %v976 = vadd.f32 %v974, %v975
      %v977 = vrot.slane %v976, 2
      %v978 = vadd.f32 %v976, %v977
      %v979 = vrot.slane %v978, 1
      %v980 = vadd.f32 %v978, %v979
      %v981 = vsel %vm286, %v783, 0.0
      %v982 = vrot.slane %v981, 4
      %v983 = vadd.f32 %v981, %v982
      %v984 = vrot.slane %v983, 2
      %v985 = vadd.f32 %v983, %v984
      %v986 = vrot.slane %v985, 1
      %v987 = vadd.f32 %v985, %v986
      %v988 = vsel %vm286, %v786, 0.0
      %v989 = vrot.slane %v988, 4
      %v990 = vadd.f32 %v988, %v989
      %v991 = vrot.slane %v990, 2
      %v992 = vadd.f32 %v990, %v991
      %v993 = vrot.slane %v992, 1
      %v994 = vadd.f32 %v992, %v993
      %v995 = vsel %vm286, %v789, 0.0
      %v996 = vrot.slane %v995, 4
      %v997 = vadd.f32 %v995, %v996
      %v998 = vrot.slane %v997, 2
      %v999 = vadd.f32 %v997, %v998
      %v1000 = vrot.slane %v999, 1
      %v1001 = vadd.f32 %v999, %v1000
      %v1002 = vsel %vm286, %v792, 0.0
      %v1003 = vrot.slane %v1002, 4
      %v1004 = vadd.f32 %v1002, %v1003
      %v1005 = vrot.slane %v1004, 2
      %v1006 = vadd.f32 %v1004, %v1005
      %v1007 = vrot.slane %v1006, 1
      %v1008 = vadd.f32 %v1006, %v1007
      %v1009 = vsel %vm286, %v795, 0.0
      %v1010 = vrot.slane %v1009, 4
      %v1011 = vadd.f32 %v1009, %v1010
      %v1012 = vrot.slane %v1011, 2
      %v1013 = vadd.f32 %v1011, %v1012
      %v1014 = vrot.slane %v1013, 1
      %v1015 = vadd.f32 %v1013, %v1014
      %v1016 = vsel %vm286, %v798, 0.0
      %v1017 = vrot.slane %v1016, 4
      %v1018 = vadd.f32 %v1016, %v1017
      %v1019 = vrot.slane %v1018, 2
      %v1020 = vadd.f32 %v1018, %v1019
      %v1021 = vrot.slane %v1020, 1
      %v1022 = vadd.f32 %v1020, %v1021
      %v1023 = vmul.f32 %v805, 0.001953125
      %v1024 = vmul.f32 %v812, 0.001953125
      %v1025 = vmul.f32 %v819, 0.001953125
      %v1026 = vmul.f32 %v826, 0.001953125
      %v1027 = vmul.f32 %v833, 0.001953125
      %v1028 = vmul.f32 %v840, 0.001953125
      %v1029 = vmul.f32 %v847, 0.001953125
      %v1030 = vmul.f32 %v854, 0.001953125
      %v1031 = vmul.f32 %v861, 0.001953125
      %v1032 = vmul.f32 %v868, 0.001953125
      %v1033 = vmul.f32 %v875, 0.001953125
      %v1034 = vmul.f32 %v882, 0.001953125
      %v1035 = vmul.f32 %v889, 0.001953125
      %v1036 = vmul.f32 %v896, 0.001953125
      %v1037 = vmul.f32 %v903, 0.001953125
      %v1038 = vmul.f32 %v910, 0.001953125
      %v1039 = vmul.f32 %v917, 0.001953125
      %v1040 = vmul.f32 %v924, 0.001953125
      %v1041 = vmul.f32 %v931, 0.001953125
      %v1042 = vmul.f32 %v938, 0.001953125
      %v1043 = vmul.f32 %v945, 0.001953125
      %v1044 = vmul.f32 %v952, 0.001953125
      %v1045 = vmul.f32 %v959, 0.001953125
      %v1046 = vmul.f32 %v966, 0.001953125
      %v1047 = vmul.f32 %v973, 0.001953125
      %v1048 = vmul.f32 %v980, 0.001953125
      %v1049 = vmul.f32 %v987, 0.001953125
      %v1050 = vmul.f32 %v994, 0.001953125
      %v1051 = vmul.f32 %v1001, 0.001953125
      %v1052 = vmul.f32 %v1008, 0.001953125
      %v1053 = vmul.f32 %v1015, 0.001953125
      %v1054 = vmul.f32 %v1022, 0.001953125
      %v1055 = vmax.f32 %v1023, 0.0
      %v1056 = vmax.f32 %v1024, 0.0
      %v1057 = vmax.f32 %v1025, 0.0
      %v1058 = vmax.f32 %v1026, 0.0
      %v1059 = vmax.f32 %v1027, 0.0
      %v1060 = vmax.f32 %v1028, 0.0
      %v1061 = vmax.f32 %v1029, 0.0
      %v1062 = vmax.f32 %v1030, 0.0
      %v1063 = vmax.f32 %v1031, 0.0
      %v1064 = vmax.f32 %v1032, 0.0
      %v1065 = vmax.f32 %v1033, 0.0
      %v1066 = vmax.f32 %v1034, 0.0
      %v1067 = vmax.f32 %v1035, 0.0
      %v1068 = vmax.f32 %v1036, 0.0
      %v1069 = vmax.f32 %v1037, 0.0
      %v1070 = vmax.f32 %v1038, 0.0
      %v1071 = vmax.f32 %v1039, 0.0
      %v1072 = vmax.f32 %v1040, 0.0
      %v1073 = vmax.f32 %v1041, 0.0
      %v1074 = vmax.f32 %v1042, 0.0
      %v1075 = vmax.f32 %v1043, 0.0
      %v1076 = vmax.f32 %v1044, 0.0
      %v1077 = vmax.f32 %v1045, 0.0
      %v1078 = vmax.f32 %v1046, 0.0
      %v1079 = vmax.f32 %v1047, 0.0
      %v1080 = vmax.f32 %v1048, 0.0
      %v1081 = vmax.f32 %v1049, 0.0
      %v1082 = vmax.f32 %v1050, 0.0
      %v1083 = vmax.f32 %v1051, 0.0
      %v1084 = vmax.f32 %v1052, 0.0
      %v1085 = vmax.f32 %v1053, 0.0
      %v1086 = vmax.f32 %v1054, 0.0
      %v1087 = vadd.f32 %v1055, 1e-06
      %v1088 = vadd.f32 %v1056, 1e-06
      %v1089 = vadd.f32 %v1057, 1e-06
      %v1090 = vadd.f32 %v1058, 1e-06
      %v1091 = vadd.f32 %v1059, 1e-06
      %v1092 = vadd.f32 %v1060, 1e-06
      %v1093 = vadd.f32 %v1061, 1e-06
      %v1094 = vadd.f32 %v1062, 1e-06
      %v1095 = vadd.f32 %v1063, 1e-06
      %v1096 = vadd.f32 %v1064, 1e-06
      %v1097 = vadd.f32 %v1065, 1e-06
      %v1098 = vadd.f32 %v1066, 1e-06
      %v1099 = vadd.f32 %v1067, 1e-06
      %v1100 = vadd.f32 %v1068, 1e-06
      %v1101 = vadd.f32 %v1069, 1e-06
      %v1102 = vadd.f32 %v1070, 1e-06
      %v1103 = vadd.f32 %v1071, 1e-06
      %v1104 = vadd.f32 %v1072, 1e-06
      %v1105 = vadd.f32 %v1073, 1e-06
      %v1106 = vadd.f32 %v1074, 1e-06
      %v1107 = vadd.f32 %v1075, 1e-06
      %v1108 = vadd.f32 %v1076, 1e-06
      %v1109 = vadd.f32 %v1077, 1e-06
      %v1110 = vadd.f32 %v1078, 1e-06
      %v1111 = vadd.f32 %v1079, 1e-06
      %v1112 = vadd.f32 %v1080, 1e-06
      %v1113 = vadd.f32 %v1081, 1e-06
      %v1114 = vadd.f32 %v1082, 1e-06
      %v1115 = vadd.f32 %v1083, 1e-06
      %v1116 = vadd.f32 %v1084, 1e-06
      %v1117 = vadd.f32 %v1085, 1e-06
      %v1118 = vadd.f32 %v1086, 1e-06
      %v1119 = vrsqrt.pop %v1087
      %v1120 = vrsqrt.pop %v1088
      %v1121 = vrsqrt.pop %v1089
      %v1122 = vrsqrt.pop %v1090
      %v1123 = vrsqrt.pop %v1091
      %v1124 = vrsqrt.pop %v1092
      %v1125 = vrsqrt.pop %v1093
      %v1126 = vrsqrt.pop %v1094
      %v1127 = vrsqrt.pop %v1095
      %v1128 = vrsqrt.pop %v1096
      %v1129 = vrsqrt.pop %v1097
      %v1130 = vrsqrt.pop %v1098
      %v1131 = vrsqrt.pop %v1099
      %v1132 = vrsqrt.pop %v1100
      %v1133 = vrsqrt.pop %v1101
      %v1134 = vrsqrt.pop %v1102
      %v1135 = vrsqrt.pop %v1103
      %v1136 = vrsqrt.pop %v1104
      %v1137 = vrsqrt.pop %v1105
      %v1138 = vrsqrt.pop %v1106
      %v1139 = vrsqrt.pop %v1107
      %v1140 = vrsqrt.pop %v1108
      %v1141 = vrsqrt.pop %v1109
      %v1142 = vrsqrt.pop %v1110
      %v1143 = vrsqrt.pop %v1111
      %v1144 = vrsqrt.pop %v1112
      %v1145 = vrsqrt.pop %v1113
      %v1146 = vrsqrt.pop %v1114
      %v1147 = vrsqrt.pop %v1115
      %v1148 = vrsqrt.pop %v1116
      %v1149 = vrsqrt.pop %v1117
      %v1150 = vrsqrt.pop %v1118
      %v1151 = vld [vmem:[%s236] sm:$0xf]
      %v1152 = vld [vmem:[%s236 + $0x4] sm:$0xf]
      %v1153 = vld [vmem:[%s236 + $0x8] sm:$0xf]
      %v1154 = vld [vmem:[%s236 + $0xc] sm:$0xf]
      %v1155 = vld [vmem:[%s236 + $0x10] sm:$0xf]
      %v1156 = vld [vmem:[%s236 + $0x14] sm:$0xf]
      %v1157 = vld [vmem:[%s236 + $0x18] sm:$0xf]
      %v1158 = vld [vmem:[%s236 + $0x1c] sm:$0xf]
      %v1159 = vld [vmem:[%s236 + $0x20] sm:$0xf]
      %v1160 = vld [vmem:[%s236 + $0x24] sm:$0xf]
      %v1161 = vld [vmem:[%s236 + $0x28] sm:$0xf]
      %v1162 = vld [vmem:[%s236 + $0x2c] sm:$0xf]
      %v1163 = vld [vmem:[%s236 + $0x30] sm:$0xf]
      %v1164 = vld [vmem:[%s236 + $0x34] sm:$0xf]
      %v1165 = vld [vmem:[%s236 + $0x38] sm:$0xf]
      %v1166 = vld [vmem:[%s236 + $0x3c] sm:$0xf]
      %v1167 = vld [vmem:[%s236 + $0x40] sm:$0xf]
      %v1168 = vld [vmem:[%s236 + $0x44] sm:$0xf]
      %v1169 = vld [vmem:[%s236 + $0x48] sm:$0xf]
      %v1170 = vld [vmem:[%s236 + $0x4c] sm:$0xf]
      %v1171 = vld [vmem:[%s236 + $0x50] sm:$0xf]
      %v1172 = vld [vmem:[%s236 + $0x54] sm:$0xf]
      %v1173 = vld [vmem:[%s236 + $0x58] sm:$0xf]
      %v1174 = vld [vmem:[%s236 + $0x5c] sm:$0xf]
      %v1175 = vld [vmem:[%s236 + $0x60] sm:$0xf]
      %v1176 = vld [vmem:[%s236 + $0x64] sm:$0xf]
      %v1177 = vld [vmem:[%s236 + $0x68] sm:$0xf]
      %v1178 = vld [vmem:[%s236 + $0x6c] sm:$0xf]
      %v1179 = vld [vmem:[%s236 + $0x70] sm:$0xf]
      %v1180 = vld [vmem:[%s236 + $0x74] sm:$0xf]
      %v1181 = vld [vmem:[%s236 + $0x78] sm:$0xf]
      %v1182 = vld [vmem:[%s236 + $0x7c] sm:$0xf]
      %v1183 = vmul.f32 %v1151, %v1119
      %v1184 = vmul.f32 %v1152, %v1120
      %v1185 = vmul.f32 %v1153, %v1121
      %v1186 = vmul.f32 %v1154, %v1122
      %v1187 = vmul.f32 %v1155, %v1123
      %v1188 = vmul.f32 %v1156, %v1124
      %v1189 = vmul.f32 %v1157, %v1125
      %v1190 = vmul.f32 %v1158, %v1126
      %v1191 = vmul.f32 %v1159, %v1127
      %v1192 = vmul.f32 %v1160, %v1128
      %v1193 = vmul.f32 %v1161, %v1129
      %v1194 = vmul.f32 %v1162, %v1130
      %v1195 = vmul.f32 %v1163, %v1131
      %v1196 = vmul.f32 %v1164, %v1132
      %v1197 = vmul.f32 %v1165, %v1133
      %v1198 = vmul.f32 %v1166, %v1134
      %v1199 = vmul.f32 %v1167, %v1135
      %v1200 = vmul.f32 %v1168, %v1136
      %v1201 = vmul.f32 %v1169, %v1137
      %v1202 = vmul.f32 %v1170, %v1138
      %v1203 = vmul.f32 %v1171, %v1139
      %v1204 = vmul.f32 %v1172, %v1140
      %v1205 = vmul.f32 %v1173, %v1141
      %v1206 = vmul.f32 %v1174, %v1142
      %v1207 = vmul.f32 %v1175, %v1143
      %v1208 = vmul.f32 %v1176, %v1144
      %v1209 = vmul.f32 %v1177, %v1145
      %v1210 = vmul.f32 %v1178, %v1146
      %v1211 = vmul.f32 %v1179, %v1147
      %v1212 = vmul.f32 %v1180, %v1148
      %v1213 = vmul.f32 %v1181, %v1149
      %v1214 = vmul.f32 %v1182, %v1150
      %v1215 = vld [vmem:[%s242] sm:$0xf]
      %v1216 = vld [vmem:[%s242 + $0x4] sm:$0xf]
      %v1217 = vld [vmem:[%s242 + $0x8] sm:$0xf]
      %v1218 = vld [vmem:[%s242 + $0xc] sm:$0xf]
      %v1219 = vld [vmem:[%s242 + $0x10] sm:$0xf]
      %v1220 = vld [vmem:[%s242 + $0x14] sm:$0xf]
      %v1221 = vld [vmem:[%s242 + $0x18] sm:$0xf]
      %v1222 = vld [vmem:[%s242 + $0x1c] sm:$0xf]
      %v1223 = vld [vmem:[%s242 + $0x20] sm:$0xf]
      %v1224 = vld [vmem:[%s242 + $0x24] sm:$0xf]
      %v1225 = vld [vmem:[%s242 + $0x28] sm:$0xf]
      %v1226 = vld [vmem:[%s242 + $0x2c] sm:$0xf]
      %v1227 = vld [vmem:[%s242 + $0x30] sm:$0xf]
      %v1228 = vld [vmem:[%s242 + $0x34] sm:$0xf]
      %v1229 = vld [vmem:[%s242 + $0x38] sm:$0xf]
      %v1230 = vld [vmem:[%s242 + $0x3c] sm:$0xf]
      %v1231 = vld [vmem:[%s242 + $0x40] sm:$0xf]
      %v1232 = vld [vmem:[%s242 + $0x44] sm:$0xf]
      %v1233 = vld [vmem:[%s242 + $0x48] sm:$0xf]
      %v1234 = vld [vmem:[%s242 + $0x4c] sm:$0xf]
      %v1235 = vld [vmem:[%s242 + $0x50] sm:$0xf]
      %v1236 = vld [vmem:[%s242 + $0x54] sm:$0xf]
      %v1237 = vld [vmem:[%s242 + $0x58] sm:$0xf]
      %v1238 = vld [vmem:[%s242 + $0x5c] sm:$0xf]
      %v1239 = vld [vmem:[%s242 + $0x60] sm:$0xf]
      %v1240 = vld [vmem:[%s242 + $0x64] sm:$0xf]
      %v1241 = vld [vmem:[%s242 + $0x68] sm:$0xf]
      %v1242 = vld [vmem:[%s242 + $0x6c] sm:$0xf]
      %v1243 = vld [vmem:[%s242 + $0x70] sm:$0xf]
      %v1244 = vld [vmem:[%s242 + $0x74] sm:$0xf]
      %v1245 = vld [vmem:[%s242 + $0x78] sm:$0xf]
      %v1246 = vld [vmem:[%s242 + $0x7c] sm:$0xf]
      %v1247 = vmul.f32 %v607, %v1183
      %v1248 = vmul.f32 %v608, %v1184
      %v1249 = vmul.f32 %v609, %v1185
      %v1250 = vmul.f32 %v610, %v1186
      %v1251 = vmul.f32 %v611, %v1187
      %v1252 = vmul.f32 %v612, %v1188
      %v1253 = vmul.f32 %v613, %v1189
      %v1254 = vmul.f32 %v614, %v1190
      %v1255 = vmul.f32 %v615, %v1191
      %v1256 = vmul.f32 %v616, %v1192
      %v1257 = vmul.f32 %v617, %v1193
      %v1258 = vmul.f32 %v618, %v1194
      %v1259 = vmul.f32 %v619, %v1195
      %v1260 = vmul.f32 %v620, %v1196
      %v1261 = vmul.f32 %v621, %v1197
      %v1262 = vmul.f32 %v622, %v1198
      %v1263 = vmul.f32 %v623, %v1199
      %v1264 = vmul.f32 %v624, %v1200
      %v1265 = vmul.f32 %v625, %v1201
      %v1266 = vmul.f32 %v626, %v1202
      %v1267 = vmul.f32 %v627, %v1203
      %v1268 = vmul.f32 %v628, %v1204
      %v1269 = vmul.f32 %v629, %v1205
      %v1270 = vmul.f32 %v630, %v1206
      %v1271 = vmul.f32 %v631, %v1207
      %v1272 = vmul.f32 %v632, %v1208
      %v1273 = vmul.f32 %v633, %v1209
      %v1274 = vmul.f32 %v634, %v1210
      %v1275 = vmul.f32 %v635, %v1211
      %v1276 = vmul.f32 %v636, %v1212
      %v1277 = vmul.f32 %v637, %v1213
      %v1278 = vmul.f32 %v638, %v1214
      %v1279 = vsub.f32 %v1215, %v1247
      %v1280 = vsub.f32 %v1216, %v1248
      %v1281 = vsub.f32 %v1217, %v1249
      %v1282 = vsub.f32 %v1218, %v1250
      %v1283 = vsub.f32 %v1219, %v1251
      %v1284 = vsub.f32 %v1220, %v1252
      %v1285 = vsub.f32 %v1221, %v1253
      %v1286 = vsub.f32 %v1222, %v1254
      %v1287 = vsub.f32 %v1223, %v1255
      %v1288 = vsub.f32 %v1224, %v1256
      %v1289 = vsub.f32 %v1225, %v1257
      %v1290 = vsub.f32 %v1226, %v1258
      %v1291 = vsub.f32 %v1227, %v1259
      %v1292 = vsub.f32 %v1228, %v1260
      %v1293 = vsub.f32 %v1229, %v1261
      %v1294 = vsub.f32 %v1230, %v1262
      %v1295 = vsub.f32 %v1231, %v1263
      %v1296 = vsub.f32 %v1232, %v1264
      %v1297 = vsub.f32 %v1233, %v1265
      %v1298 = vsub.f32 %v1234, %v1266
      %v1299 = vsub.f32 %v1235, %v1267
      %v1300 = vsub.f32 %v1236, %v1268
      %v1301 = vsub.f32 %v1237, %v1269
      %v1302 = vsub.f32 %v1238, %v1270
      %v1303 = vsub.f32 %v1239, %v1271
      %v1304 = vsub.f32 %v1240, %v1272
      %v1305 = vsub.f32 %v1241, %v1273
      %v1306 = vsub.f32 %v1242, %v1274
      %v1307 = vsub.f32 %v1243, %v1275
      %v1308 = vsub.f32 %v1244, %v1276
      %v1309 = vsub.f32 %v1245, %v1277
      %v1310 = vsub.f32 %v1246, %v1278
      %1312 = vset.pattern.permute.xlu0 0
      %1313 = vperm.xlu0 %1312, %v1183
      %v1314 = vpop.permute.xlu0 %1313
      %1317 = vset.pattern.permute.xlu0 0
      %1318 = vperm.xlu0 %1317, %v1184
      %v1319 = vpop.permute.xlu0 %1318
      %1322 = vset.pattern.permute.xlu0 0
      %1323 = vperm.xlu0 %1322, %v1185
      %v1324 = vpop.permute.xlu0 %1323
      %1327 = vset.pattern.permute.xlu0 0
      %1328 = vperm.xlu0 %1327, %v1186
      %v1329 = vpop.permute.xlu0 %1328
      %1332 = vset.pattern.permute.xlu0 0
      %1333 = vperm.xlu0 %1332, %v1187
      %v1334 = vpop.permute.xlu0 %1333
      %1337 = vset.pattern.permute.xlu0 0
      %1338 = vperm.xlu0 %1337, %v1188
      %v1339 = vpop.permute.xlu0 %1338
      %1342 = vset.pattern.permute.xlu0 0
      %1343 = vperm.xlu0 %1342, %v1189
      %v1344 = vpop.permute.xlu0 %1343
      %1347 = vset.pattern.permute.xlu0 0
      %1348 = vperm.xlu0 %1347, %v1190
      %v1349 = vpop.permute.xlu0 %1348
      %1352 = vset.pattern.permute.xlu0 0
      %1353 = vperm.xlu0 %1352, %v1191
      %v1354 = vpop.permute.xlu0 %1353
      %1357 = vset.pattern.permute.xlu0 0
      %1358 = vperm.xlu0 %1357, %v1192
      %v1359 = vpop.permute.xlu0 %1358
      %1362 = vset.pattern.permute.xlu0 0
      %1363 = vperm.xlu0 %1362, %v1193
      %v1364 = vpop.permute.xlu0 %1363
      %1367 = vset.pattern.permute.xlu0 0
      %1368 = vperm.xlu0 %1367, %v1194
      %v1369 = vpop.permute.xlu0 %1368
      %1372 = vset.pattern.permute.xlu0 0
      %1373 = vperm.xlu0 %1372, %v1195
      %v1374 = vpop.permute.xlu0 %1373
      %1377 = vset.pattern.permute.xlu0 0
      %1378 = vperm.xlu0 %1377, %v1196
      %v1379 = vpop.permute.xlu0 %1378
      %1382 = vset.pattern.permute.xlu0 0
      %1383 = vperm.xlu0 %1382, %v1197
      %v1384 = vpop.permute.xlu0 %1383
      %1387 = vset.pattern.permute.xlu0 0
      %1388 = vperm.xlu0 %1387, %v1198
      %v1389 = vpop.permute.xlu0 %1388
      %1392 = vset.pattern.permute.xlu0 0
      %1393 = vperm.xlu0 %1392, %v1199
      %v1394 = vpop.permute.xlu0 %1393
      %1397 = vset.pattern.permute.xlu0 0
      %1398 = vperm.xlu0 %1397, %v1200
      %v1399 = vpop.permute.xlu0 %1398
      %1402 = vset.pattern.permute.xlu0 0
      %1403 = vperm.xlu0 %1402, %v1201
      %v1404 = vpop.permute.xlu0 %1403
      %1407 = vset.pattern.permute.xlu0 0
      %1408 = vperm.xlu0 %1407, %v1202
      %v1409 = vpop.permute.xlu0 %1408
      %1412 = vset.pattern.permute.xlu0 0
      %1413 = vperm.xlu0 %1412, %v1203
      %v1414 = vpop.permute.xlu0 %1413
      %1417 = vset.pattern.permute.xlu0 0
      %1418 = vperm.xlu0 %1417, %v1204
      %v1419 = vpop.permute.xlu0 %1418
      %1422 = vset.pattern.permute.xlu0 0
      %1423 = vperm.xlu0 %1422, %v1205
      %v1424 = vpop.permute.xlu0 %1423
      %1427 = vset.pattern.permute.xlu0 0
      %1428 = vperm.xlu0 %1427, %v1206
      %v1429 = vpop.permute.xlu0 %1428
      %1432 = vset.pattern.permute.xlu0 0
      %1433 = vperm.xlu0 %1432, %v1207
      %v1434 = vpop.permute.xlu0 %1433
      %1437 = vset.pattern.permute.xlu0 0
      %1438 = vperm.xlu0 %1437, %v1208
      %v1439 = vpop.permute.xlu0 %1438
      %1442 = vset.pattern.permute.xlu0 0
      %1443 = vperm.xlu0 %1442, %v1209
      %v1444 = vpop.permute.xlu0 %1443
      %1447 = vset.pattern.permute.xlu0 0
      %1448 = vperm.xlu0 %1447, %v1210
      %v1449 = vpop.permute.xlu0 %1448
      %1452 = vset.pattern.permute.xlu0 0
      %1453 = vperm.xlu0 %1452, %v1211
      %v1454 = vpop.permute.xlu0 %1453
      %1457 = vset.pattern.permute.xlu0 0
      %1458 = vperm.xlu0 %1457, %v1212
      %v1459 = vpop.permute.xlu0 %1458
      %1462 = vset.pattern.permute.xlu0 0
      %1463 = vperm.xlu0 %1462, %v1213
      %v1464 = vpop.permute.xlu0 %1463
      %1467 = vset.pattern.permute.xlu0 0
      %1468 = vperm.xlu0 %1467, %v1214
      %v1469 = vpop.permute.xlu0 %1468
      %v1471 = vmul.f32 %v254, %v1314
      %v1472 = vmul.f32 %v255, %v1319
      %v1473 = vmul.f32 %v256, %v1324
      %v1474 = vmul.f32 %v257, %v1329
      %v1475 = vmul.f32 %v258, %v1334
      %v1476 = vmul.f32 %v259, %v1339
      %v1477 = vmul.f32 %v260, %v1344
      %v1478 = vmul.f32 %v261, %v1349
      %v1479 = vmul.f32 %v262, %v1354
      %v1480 = vmul.f32 %v263, %v1359
      %v1481 = vmul.f32 %v264, %v1364
      %v1482 = vmul.f32 %v265, %v1369
      %v1483 = vmul.f32 %v266, %v1374
      %v1484 = vmul.f32 %v267, %v1379
      %v1485 = vmul.f32 %v268, %v1384
      %v1486 = vmul.f32 %v269, %v1389
      %v1487 = vmul.f32 %v270, %v1394
      %v1488 = vmul.f32 %v271, %v1399
      %v1489 = vmul.f32 %v272, %v1404
      %v1490 = vmul.f32 %v273, %v1409
      %v1491 = vmul.f32 %v274, %v1414
      %v1492 = vmul.f32 %v275, %v1419
      %v1493 = vmul.f32 %v276, %v1424
      %v1494 = vmul.f32 %v277, %v1429
      %v1495 = vmul.f32 %v278, %v1434
      %v1496 = vmul.f32 %v279, %v1439
      %v1497 = vmul.f32 %v280, %v1444
      %v1498 = vmul.f32 %v281, %v1449
      %v1499 = vmul.f32 %v282, %v1454
      %v1500 = vmul.f32 %v283, %v1459
      %v1501 = vmul.f32 %v284, %v1464
      %v1502 = vmul.f32 %v285, %v1469
      %1504 = vset.pattern.permute.xlu0 0
      %1505 = vperm.xlu0 %1504, %v1279
      %v1506 = vpop.permute.xlu0 %1505
      %1509 = vset.pattern.permute.xlu0 0
      %1510 = vperm.xlu0 %1509, %v1280
      %v1511 = vpop.permute.xlu0 %1510
      %1514 = vset.pattern.permute.xlu0 0
      %1515 = vperm.xlu0 %1514, %v1281
      %v1516 = vpop.permute.xlu0 %1515
      %1519 = vset.pattern.permute.xlu0 0
      %1520 = vperm.xlu0 %1519, %v1282
      %v1521 = vpop.permute.xlu0 %1520
      %1524 = vset.pattern.permute.xlu0 0
      %1525 = vperm.xlu0 %1524, %v1283
      %v1526 = vpop.permute.xlu0 %1525
      %1529 = vset.pattern.permute.xlu0 0
      %1530 = vperm.xlu0 %1529, %v1284
      %v1531 = vpop.permute.xlu0 %1530
      %1534 = vset.pattern.permute.xlu0 0
      %1535 = vperm.xlu0 %1534, %v1285
      %v1536 = vpop.permute.xlu0 %1535
      %1539 = vset.pattern.permute.xlu0 0
      %1540 = vperm.xlu0 %1539, %v1286
      %v1541 = vpop.permute.xlu0 %1540
      %1544 = vset.pattern.permute.xlu0 0
      %1545 = vperm.xlu0 %1544, %v1287
      %v1546 = vpop.permute.xlu0 %1545
      %1549 = vset.pattern.permute.xlu0 0
      %1550 = vperm.xlu0 %1549, %v1288
      %v1551 = vpop.permute.xlu0 %1550
      %1554 = vset.pattern.permute.xlu0 0
      %1555 = vperm.xlu0 %1554, %v1289
      %v1556 = vpop.permute.xlu0 %1555
      %1559 = vset.pattern.permute.xlu0 0
      %1560 = vperm.xlu0 %1559, %v1290
      %v1561 = vpop.permute.xlu0 %1560
      %1564 = vset.pattern.permute.xlu0 0
      %1565 = vperm.xlu0 %1564, %v1291
      %v1566 = vpop.permute.xlu0 %1565
      %1569 = vset.pattern.permute.xlu0 0
      %1570 = vperm.xlu0 %1569, %v1292
      %v1571 = vpop.permute.xlu0 %1570
      %1574 = vset.pattern.permute.xlu0 0
      %1575 = vperm.xlu0 %1574, %v1293
      %v1576 = vpop.permute.xlu0 %1575
      %1579 = vset.pattern.permute.xlu0 0
      %1580 = vperm.xlu0 %1579, %v1294
      %v1581 = vpop.permute.xlu0 %1580
      %1584 = vset.pattern.permute.xlu0 0
      %1585 = vperm.xlu0 %1584, %v1295
      %v1586 = vpop.permute.xlu0 %1585
      %1589 = vset.pattern.permute.xlu0 0
      %1590 = vperm.xlu0 %1589, %v1296
      %v1591 = vpop.permute.xlu0 %1590
      %1594 = vset.pattern.permute.xlu0 0
      %1595 = vperm.xlu0 %1594, %v1297
      %v1596 = vpop.permute.xlu0 %1595
      %1599 = vset.pattern.permute.xlu0 0
      %1600 = vperm.xlu0 %1599, %v1298
      %v1601 = vpop.permute.xlu0 %1600
      %1604 = vset.pattern.permute.xlu0 0
      %1605 = vperm.xlu0 %1604, %v1299
      %v1606 = vpop.permute.xlu0 %1605
      %1609 = vset.pattern.permute.xlu0 0
      %1610 = vperm.xlu0 %1609, %v1300
      %v1611 = vpop.permute.xlu0 %1610
      %1614 = vset.pattern.permute.xlu0 0
      %1615 = vperm.xlu0 %1614, %v1301
      %v1616 = vpop.permute.xlu0 %1615
      %1619 = vset.pattern.permute.xlu0 0
      %1620 = vperm.xlu0 %1619, %v1302
      %v1621 = vpop.permute.xlu0 %1620
      %1624 = vset.pattern.permute.xlu0 0
      %1625 = vperm.xlu0 %1624, %v1303
      %v1626 = vpop.permute.xlu0 %1625
      %1629 = vset.pattern.permute.xlu0 0
      %1630 = vperm.xlu0 %1629, %v1304
      %v1631 = vpop.permute.xlu0 %1630
      %1634 = vset.pattern.permute.xlu0 0
      %1635 = vperm.xlu0 %1634, %v1305
      %v1636 = vpop.permute.xlu0 %1635
      %1639 = vset.pattern.permute.xlu0 0
      %1640 = vperm.xlu0 %1639, %v1306
      %v1641 = vpop.permute.xlu0 %1640
      %1644 = vset.pattern.permute.xlu0 0
      %1645 = vperm.xlu0 %1644, %v1307
      %v1646 = vpop.permute.xlu0 %1645
      %1649 = vset.pattern.permute.xlu0 0
      %1650 = vperm.xlu0 %1649, %v1308
      %v1651 = vpop.permute.xlu0 %1650
      %1654 = vset.pattern.permute.xlu0 0
      %1655 = vperm.xlu0 %1654, %v1309
      %v1656 = vpop.permute.xlu0 %1655
      %1659 = vset.pattern.permute.xlu0 0
      %1660 = vperm.xlu0 %1659, %v1310
      %v1661 = vpop.permute.xlu0 %1660
      %v1663 = vadd.f32 %v1471, %v1506
      %v1664 = vadd.f32 %v1472, %v1511
      %v1665 = vadd.f32 %v1473, %v1516
      %v1666 = vadd.f32 %v1474, %v1521
      %v1667 = vadd.f32 %v1475, %v1526
      %v1668 = vadd.f32 %v1476, %v1531
      %v1669 = vadd.f32 %v1477, %v1536
      %v1670 = vadd.f32 %v1478, %v1541
      %v1671 = vadd.f32 %v1479, %v1546
      %v1672 = vadd.f32 %v1480, %v1551
      %v1673 = vadd.f32 %v1481, %v1556
      %v1674 = vadd.f32 %v1482, %v1561
      %v1675 = vadd.f32 %v1483, %v1566
      %v1676 = vadd.f32 %v1484, %v1571
      %v1677 = vadd.f32 %v1485, %v1576
      %v1678 = vadd.f32 %v1486, %v1581
      %v1679 = vadd.f32 %v1487, %v1586
      %v1680 = vadd.f32 %v1488, %v1591
      %v1681 = vadd.f32 %v1489, %v1596
      %v1682 = vadd.f32 %v1490, %v1601
      %v1683 = vadd.f32 %v1491, %v1606
      %v1684 = vadd.f32 %v1492, %v1611
      %v1685 = vadd.f32 %v1493, %v1616
      %v1686 = vadd.f32 %v1494, %v1621
      %v1687 = vadd.f32 %v1495, %v1626
      %v1688 = vadd.f32 %v1496, %v1631
      %v1689 = vadd.f32 %v1497, %v1636
      %v1690 = vadd.f32 %v1498, %v1641
      %v1691 = vadd.f32 %v1499, %v1646
      %v1692 = vadd.f32 %v1500, %v1651
      %v1693 = vadd.f32 %v1501, %v1656
      %v1694 = vadd.f32 %v1502, %v1661
      %1695 = vst [vmem:[%s252] sm:$0xf] %v1663
      %1696 = vst [vmem:[%s252 + $0x4] sm:$0xf] %v1664
      %1697 = vst [vmem:[%s252 + $0x8] sm:$0xf] %v1665
      %1698 = vst [vmem:[%s252 + $0xc] sm:$0xf] %v1666
      %1699 = vst [vmem:[%s252 + $0x10] sm:$0xf] %v1667
      %1700 = vst [vmem:[%s252 + $0x14] sm:$0xf] %v1668
      %1701 = vst [vmem:[%s252 + $0x18] sm:$0xf] %v1669
      %1702 = vst [vmem:[%s252 + $0x1c] sm:$0xf] %v1670
      %1703 = vst [vmem:[%s252 + $0x20] sm:$0xf] %v1671
      %1704 = vst [vmem:[%s252 + $0x24] sm:$0xf] %v1672
      %1705 = vst [vmem:[%s252 + $0x28] sm:$0xf] %v1673
      %1706 = vst [vmem:[%s252 + $0x2c] sm:$0xf] %v1674
      %1707 = vst [vmem:[%s252 + $0x30] sm:$0xf] %v1675
      %1708 = vst [vmem:[%s252 + $0x34] sm:$0xf] %v1676
      %1709 = vst [vmem:[%s252 + $0x38] sm:$0xf] %v1677
      %1710 = vst [vmem:[%s252 + $0x3c] sm:$0xf] %v1678
      %1711 = vst [vmem:[%s252 + $0x40] sm:$0xf] %v1679
      %1712 = vst [vmem:[%s252 + $0x44] sm:$0xf] %v1680
      %1713 = vst [vmem:[%s252 + $0x48] sm:$0xf] %v1681
      %1714 = vst [vmem:[%s252 + $0x4c] sm:$0xf] %v1682
      %1715 = vst [vmem:[%s252 + $0x50] sm:$0xf] %v1683
      %1716 = vst [vmem:[%s252 + $0x54] sm:$0xf] %v1684
      %1717 = vst [vmem:[%s252 + $0x58] sm:$0xf] %v1685
      %1718 = vst [vmem:[%s252 + $0x5c] sm:$0xf] %v1686
      %1719 = vst [vmem:[%s252 + $0x60] sm:$0xf] %v1687
      %1720 = vst [vmem:[%s252 + $0x64] sm:$0xf] %v1688
      %1721 = vst [vmem:[%s252 + $0x68] sm:$0xf] %v1689
      %1722 = vst [vmem:[%s252 + $0x6c] sm:$0xf] %v1690
      %1723 = vst [vmem:[%s252 + $0x70] sm:$0xf] %v1691
      %1724 = vst [vmem:[%s252 + $0x74] sm:$0xf] %v1692
      %1725 = vst [vmem:[%s252 + $0x78] sm:$0xf] %v1693
      %1726 = vst [vmem:[%s252 + $0x7c] sm:$0xf] %v1694
      %s1727 = smul.u32 32, %s18
      %p1728 = scmp.lt.s32.totalorder %s19, 1
      %s1729 = scalar_select %p1728, %s19, 1
      %p1730 = scmp.lt.s32.totalorder %s1727, 31
      %s1731 = scalar_select %p1730, %s1727, 31
      %s1732 = smul.addr %s1729, 32
      %s1733 = sadd.s32 %s1731, %s1732
      %s1734 = smul.addr %s1733, 4
      %s1735 = scalar_lea.vmem %s3, %s1734
      // Predicated region
      $region33: #{group_norm_pallas.1} parent=31 // pred_check
        %p1736 = pneg %p126
      $region34: #{group_norm_pallas.1} parent=31 // pred_check_branch
        %1738 = sbr.rel (%p1736) target = $region36
      $region35: #{group_norm_pallas.1} parent=31 // pred_region
        %s1739 = smul.u32 32, %s18
      $region36: #{group_norm_pallas.1} parent=31 // pred_fallthru
        _
    $region32: #{group_norm_pallas.1} parent=5 // pred_fallthru
      _
    %p1740 = scmp.le.s32.totalorder 2, %s9
    // Predicated region
    $region37: #{group_norm_pallas.1} parent=5 // pred_check
      %p1741 = pneg %p1740
    $region38: #{group_norm_pallas.1} parent=5 // pred_check_branch
      %1743 = sbr.rel (%p1741) target = $region40
    $region39: #{group_norm_pallas.1} parent=5 // pred_region
      %s1744 = ssub.s32 %s9, 2
      // Predicated region
      $region41: #{group_norm_pallas.1} parent=39 // pred_check
        %p1745 = pneg %p132
      $region42: #{group_norm_pallas.1} parent=39 // pred_check_branch
        %1747 = sbr.rel (%p1745) target = $region44
      $region43: #{group_norm_pallas.1} parent=39 // pred_region
        %s1748 = smul.u32 32, %s20
        %p1749 = scmp.lt.s32.totalorder %s21, 1
        %s1750 = scalar_select %p1749, %s21, 1
        %p1751 = scmp.lt.s32.totalorder %s1748, 31
        %s1752 = scalar_select %p1751, %s1748, 31
        %s1753 = smul.addr %s1750, 32
        %s1754 = sadd.s32 %s1752, %s1753
        %s1755 = smul.addr %s1754, 4
        %s1756 = scalar_lea.vmem %s3, %s1755
      $region44: #{group_norm_pallas.1} parent=39 // pred_fallthru
        _
    $region40: #{group_norm_pallas.1} parent=5 // pred_fallthru
      _
  $region6: #{group_norm_pallas.1} parent=0 // loop_footer
    %s13 = sadd.s32 1, %s9
  $region7: #{group_norm_pallas.1} parent=0 // loop_footer_branch
    %8 = sbr.rel target = $region3
  $region8: #{group_norm_pallas.1} parent=0 // loop_exit
    _

</llo_original>
